<compile_context>
chip_gen: v7x
topology: tpu7x:2x2x1
jax: 0.10.0
libtpu: 0.0.40
codegen_flags: <defaults>
</compile_context>

<pallas_src>
import math
import functools

import jax
import jax.numpy as jnp
from jax import lax
from jax.experimental import pallas as pl
from jax.experimental.pallas import tpu as pltpu


def causal_attn_kernel(x_ref, wqkv_ref, bqkv_ref, wp_ref, bp_ref,
                       y_ref, att_ref, *, n_head, compute_dtype):
    """One grid step == one block of Bb batch elements (all heads)."""
    Bb, T, C = x_ref.shape
    hs = C // n_head
    scale = 1.0 / math.sqrt(hs)
    cd = compute_dtype

    # ---- single full-width QKV projection: (Bb*T, C) @ (C, 3C) --------------
    x2 = x_ref[...].reshape(Bb * T, C).astype(cd)
    qkv = jnp.dot(x2, wqkv_ref[...].astype(cd),
                  preferred_element_type=jnp.float32)
    qkv = qkv + bqkv_ref[...]                       # (Bb*T, 3C), f32

    # ---- causal mask: one (T, T) comparison, broadcast over Bb --------------
    row = lax.broadcasted_iota(jnp.int32, (T, T), 0)
    col = lax.broadcasted_iota(jnp.int32, (T, T), 1)
    causal = (row >= col)[None]                     # (1, T, T) bool
    neg = jnp.float32(-1e30)                        # finite: no NaN on masked rows

    # ---- per-head attention (static unroll, static lane slices) -------------
    o_heads = []
    for h in range(n_head):
        # fold 1/sqrt(hs) into q (Bb*T*hs multiply instead of Bb*T*T)
        q = (qkv[:, h * hs:(h + 1) * hs] * scale).reshape(Bb, T, hs)
        k = qkv[:, C + h * hs:C + (h + 1) * hs].reshape(Bb, T, hs)
        v = qkv[:, 2 * C + h * hs:2 * C + (h + 1) * hs].reshape(Bb, T, hs)

        s = jnp.einsum("bqd,bkd->bqk", q.astype(cd), k.astype(cd),
                       preferred_element_type=jnp.float32)
        s = jnp.where(causal, s, neg)

        # numerically-stable softmax in f32; exact reciprocal so the saved
        # attention rows sum to 1 (attn_save is returned to the caller).
        s = s - jnp.max(s, axis=-1, keepdims=True)
        p = jnp.exp(s)
        p = p * pl.reciprocal(jnp.sum(p, axis=-1, keepdims=True), approx=False)

        att_ref[:, h, :, :] = p.astype(att_ref.dtype)       # attn_save, head h

        o_heads.append(jnp.einsum("bqk,bkd->bqd", p.astype(cd), v.astype(cd),
                                  preferred_element_type=jnp.float32))

    # ---- single full-width output projection: (Bb*T, C) @ (C, C) ------------
    o = jnp.concatenate(o_heads, axis=-1).reshape(Bb * T, C)  # == transpose(1,2).view
    y = jnp.dot(o.astype(cd), wp_ref[...].astype(cd),
                preferred_element_type=jnp.float32) + bp_ref[...]
    y_ref[...] = y.reshape(Bb, T, C).astype(y_ref.dtype)


def _working_set_bytes(bb, T, C, n_head, cw, out_bytes, att_bytes):
    """Rough per-grid-step VMEM working set (incl. double-buffered I/O blocks)."""
    rows = bb * T
    return (2 * rows * C * cw                       # x block (double buffered)
            + 2 * rows * C * out_bytes              # y block (double buffered)
            + 2 * bb * n_head * T * T * att_bytes   # att block (double buffered)
            + rows * 3 * C * 4                      # qkv f32 intermediate
            + 3 * bb * n_head * T * T * 4           # scores / exp live copies (f32)
            + rows * C * 4)                         # concatenated per-head outputs


def _pick_block_b(B, T, C, n_head, cw, out_bytes, att_bytes,
                  budget=24 * 1024 * 1024, target_rows=256):
    """VMEM- and MXU-aware Bb; keeps >=2 grid blocks when possible (v7x 2 TCs)."""
    divs = [d for d in range(1, B + 1) if B % d == 0]
    feasible = [d for d in divs
                if _working_set_bytes(d, T, C, n_head, cw, out_bytes, att_bytes)
                <= budget] or [1]
    multi = [d for d in feasible if B // d >= 2]    # let the parallel axis shard
    cands = multi if multi else feasible
    for d in cands:                                 # smallest Bb filling MXU rows
        if d * T >= target_rows:
            return d
    return cands[-1]                                # otherwise the largest feasible


def _vmem_cap_bytes():
    cap = 48 * 1024 * 1024                          # safe below v7x's 64 MiB VMEM
    try:
        info = pltpu.get_tpu_info()
        cap = min(cap, int(info.vmem_capacity_bytes * 3 // 4))
    except Exception:
        pass
    return cap


def causal_self_attention(x, params, n_head, *, compute_dtype=jnp.bfloat16,
                          attn_dtype=jnp.float32, block_b=None):
    B, T, C = x.shape
    assert C % n_head == 0
    out_dtype = x.dtype
    cw = jnp.dtype(compute_dtype).itemsize
    out_bytes = jnp.dtype(out_dtype).itemsize
    att_bytes = jnp.dtype(attn_dtype).itemsize

    Bb = (_pick_block_b(B, T, C, n_head, cw, out_bytes, att_bytes)
          if block_b is None else block_b)
    assert B % Bb == 0

    # ---- wrapper-side (one-time) weight re-layout ---------------------------
    wqkv = jnp.concatenate([params["wq"], params["wk"], params["wv"]],
                           axis=-1).astype(compute_dtype)          # (C, 3C)
    bqkv = jnp.concatenate([params["bq"], params["bk"], params["bv"]],
                           axis=-1).astype(jnp.float32)            # (1, 3C)
    wp = params["wp"].astype(compute_dtype)                        # (C, C)
    bp = params["bp"].astype(jnp.float32)                          # (1, C)
    x_c = x.astype(compute_dtype)

    kernel = functools.partial(causal_attn_kernel, n_head=n_head,
                               compute_dtype=compute_dtype)

    # Weights get constant index_maps on the 1-D grid -> fetched once, resident.
    in_specs = [
        pl.BlockSpec((Bb, T, C), lambda b: (b, 0, 0)),          # x
        pl.BlockSpec((C, 3 * C), lambda b: (0, 0)),             # fused Wqkv (resident)
        pl.BlockSpec((1, 3 * C), lambda b: (0, 0)),             # fused bias (resident)
        pl.BlockSpec((C, C), lambda b: (0, 0)),                 # Wproj (resident)
        pl.BlockSpec((1, C), lambda b: (0, 0)),                 # proj bias (resident)
    ]
    out_specs = [
        pl.BlockSpec((Bb, T, C), lambda b: (b, 0, 0)),          # y
        pl.BlockSpec((Bb, n_head, T, T), lambda b: (b, 0, 0, 0)),  # attn_save
    ]
    out_shape = [
        jax.ShapeDtypeStruct((B, T, C), out_dtype),
        jax.ShapeDtypeStruct((B, n_head, T, T), attn_dtype),
    ]

    hs = C // n_head
    cost = pl.CostEstimate(
        flops=int(2 * B * T * C * 3 * C            # qkv projection
                  + 4 * B * n_head * T * T * hs    # qk^T and p@v
                  + 2 * B * T * C * C),            # output projection
        transcendentals=int(B * n_head * T * T),
        bytes_accessed=int(cw * (B * T * C + 4 * C * C)
                           + 4 * 4 * C
                           + out_bytes * B * T * C
                           + att_bytes * B * n_head * T * T),
    )

    # VMEM accounting: raise the scoped limit only when the resident weights plus
    # the double-buffered per-step working set would not fit the default limit.
    weights_bytes = 4 * C * C * cw + 4 * C * 4
    vmem_needed = weights_bytes + _working_set_bytes(Bb, T, C, n_head, cw,
                                                     out_bytes, att_bytes)
    cp_kwargs = dict(dimension_semantics=("parallel",))
    if vmem_needed > 12 * 1024 * 1024:
        cp_kwargs["vmem_limit_bytes"] = int(min(vmem_needed + vmem_needed // 2,
                                                _vmem_cap_bytes()))

    return pl.pallas_call(
        kernel,
        grid=(B // Bb,),
        in_specs=in_specs,
        out_specs=out_specs,
        out_shape=out_shape,
        compiler_params=pltpu.CompilerParams(**cp_kwargs),
        cost_estimate=cost,
    )(x_c, wqkv, bqkv, wp, bp)


def reference_attention(x, params, n_head):
    """Pure-JAX reference mirroring the PyTorch forward (eval mode)."""
    B, T, C = x.shape
    hs = C // n_head

    def lin(t, w, b):
        return t @ w + b[0]

    q = lin(x, params["wq"], params["bq"]).reshape(B, T, n_head, hs).transpose(0, 2, 1, 3)
    k = lin(x, params["wk"], params["bk"]).reshape(B, T, n_head, hs).transpose(0, 2, 1, 3)
    v = lin(x, params["wv"], params["bv"]).reshape(B, T, n_head, hs).transpose(0, 2, 1, 3)

    att = jnp.einsum("bhqd,bhkd->bhqk", q, k) * (1.0 / math.sqrt(hs))
    mask = jnp.tril(jnp.ones((T, T), bool))
    att = jnp.where(mask[None, None], att, -jnp.inf)
    att = jax.nn.softmax(att, axis=-1)
    y = jnp.einsum("bhqk,bhkd->bhqd", att, v).transpose(0, 2, 1, 3).reshape(B, T, C)
    y = lin(y, params["wp"], params["bp"])
    return y, att


if __name__ == "__main__":
    # config: hidden_size=32, num_head=4, seq len T=8, batch B=2
    B, T, C, n_head = 2, 8, 32, 4

    key = jax.random.PRNGKey(0)
    keys = jax.random.split(key, 9)
    init = lambda k, shape, s: (s * jax.random.normal(k, shape)).astype(jnp.float32)

    params = {
        "wq": init(keys[0], (C, C), 0.05), "bq": init(keys[1], (1, C), 0.02),
        "wk": init(keys[2], (C, C), 0.05), "bk": init(keys[3], (1, C), 0.02),
        "wv": init(keys[4], (C, C), 0.05), "bv": init(keys[5], (1, C), 0.02),
        "wp": init(keys[6], (C, C), 0.05), "bp": init(keys[7], (1, C), 0.02),
    }
    x = jax.random.normal(keys[8], (B, T, C), dtype=jnp.float32)

    y_exp, att_exp = reference_attention(x, params, n_head)

    # f32 compute path (matches torch numerics; exact softmax reciprocal).
    y, att = causal_self_attention(x, params, n_head, compute_dtype=jnp.float32)
    y = jax.block_until_ready(y)
    att = jax.block_until_ready(att)
    assert y.shape == (B, T, C) and att.shape == (B, n_head, T, T)
    assert jnp.allclose(y, y_exp, atol=5e-3, rtol=5e-3)
    assert jnp.allclose(att, att_exp, atol=5e-3, rtol=5e-3)

    # default bf16 MXU-operand path (f32 accumulation + f32 softmax), looser tolerance.
    y16, att16 = causal_self_attention(x, params, n_head)
    y16 = jax.block_until_ready(y16)
    att16 = jax.block_until_ready(att16)
    assert jnp.allclose(y16, y_exp, atol=1e-1, rtol=1e-1)
    assert jnp.allclose(att16, att_exp, atol=1e-1, rtol=1e-1)

    print("KERNEL_OK")
</pallas_src>

<mosaic_0001>
module attributes {stable_mosaic.version = 11 : i64} {
  func.func @causal_attn_kernel(%arg0: i32, %arg1: memref<1x8x32xf32, #tpu.memory_space<vmem>>, %arg2: memref<32x96xf32, #tpu.memory_space<vmem>>, %arg3: memref<1x96xf32, #tpu.memory_space<vmem>>, %arg4: memref<32x32xf32, #tpu.memory_space<vmem>>, %arg5: memref<1x32xf32, #tpu.memory_space<vmem>>, %arg6: memref<1x8x32xf32, #tpu.memory_space<vmem>>, %arg7: memref<1x4x8x8xf32, #tpu.memory_space<vmem>>) attributes {dimension_semantics = [#tpu.dimension_semantics<parallel>], iteration_bounds = array<i64: 2>, scalar_prefetch = 0 : i64, scratch_operands = 0 : i64, tpu.core_type = #tpu.core_type<tc>, window_params = [{transform_indices = @transform_0, window_bounds = array<i64: 1, 8, 32>}, {pipeline_mode = #tpu.pipeline_mode<synchronous>, transform_indices = @transform_1, window_bounds = array<i64: 32, 96>}, {pipeline_mode = #tpu.pipeline_mode<synchronous>, transform_indices = @transform_2, window_bounds = array<i64: 1, 96>}, {pipeline_mode = #tpu.pipeline_mode<synchronous>, transform_indices = @transform_3, window_bounds = array<i64: 32, 32>}, {pipeline_mode = #tpu.pipeline_mode<synchronous>, transform_indices = @transform_4, window_bounds = array<i64: 1, 32>}, {transform_indices = @transform_5, window_bounds = array<i64: 1, 8, 32>}, {transform_indices = @transform_6, window_bounds = array<i64: 1, 4, 8, 8>}]} {
    %c0 = arith.constant 0 : index
    %c0_0 = arith.constant 0 : index
    %c0_1 = arith.constant 0 : index
    %0 = vector.load %arg1[%c0, %c0_0, %c0_1] : memref<1x8x32xf32, #tpu.memory_space<vmem>>, vector<1x8x32xf32>
    %1 = vector.shape_cast %0 : vector<1x8x32xf32> to vector<8x32xf32>
    %c0_2 = arith.constant 0 : index
    %c0_3 = arith.constant 0 : index
    %2 = vector.load %arg2[%c0_2, %c0_3] : memref<32x96xf32, #tpu.memory_space<vmem>>, vector<32x96xf32>
    %cst = arith.constant dense<0.000000e+00> : vector<8x96xf32>
    %3 = tpu.matmul %1, %2, %cst {dimension_numbers = #tpu.dot_dimension_numbers<[1], [0], [0], [1], [0, 0, 1, 1], [], []>} : vector<8x32xf32>, vector<32x96xf32>, vector<8x96xf32> -> vector<8x96xf32>
    %c0_4 = arith.constant 0 : index
    %c0_5 = arith.constant 0 : index
    %4 = vector.load %arg3[%c0_4, %c0_5] : memref<1x96xf32, #tpu.memory_space<vmem>>, vector<1x96xf32>
    %5 = vector.broadcast %4 : vector<1x96xf32> to vector<8x96xf32>
    %6 = arith.addf %3, %5 : vector<8x96xf32>
    %7 = tpu.iota {dimensions = array<i32: 0>} : vector<8x8xi32>
    %8 = tpu.iota {dimensions = array<i32: 1>} : vector<8x8xi32>
    %9 = arith.cmpi sge, %7, %8 : vector<8x8xi32>
    %10 = vector.shape_cast %9 : vector<8x8xi1> to vector<1x8x8xi1>
    %11 = vector.extract_strided_slice %6 {offsets = [0, 0], sizes = [8, 8], strides = [1, 1]} : vector<8x96xf32> to vector<8x8xf32>
    %cst_6 = arith.constant 0.353553385 : f32
    %12 = vector.broadcast %cst_6 : f32 to vector<8x8xf32>
    %13 = arith.mulf %11, %12 : vector<8x8xf32>
    %14 = vector.shape_cast %13 : vector<8x8xf32> to vector<1x8x8xf32>
    %15 = vector.extract_strided_slice %6 {offsets = [0, 32], sizes = [8, 8], strides = [1, 1]} : vector<8x96xf32> to vector<8x8xf32>
    %16 = vector.shape_cast %15 : vector<8x8xf32> to vector<1x8x8xf32>
    %17 = vector.extract_strided_slice %6 {offsets = [0, 64], sizes = [8, 8], strides = [1, 1]} : vector<8x96xf32> to vector<8x8xf32>
    %18 = vector.shape_cast %17 : vector<8x8xf32> to vector<1x8x8xf32>
    "tpu.trace_start"() <{level = 10 : i32, message = "bqd,bkd->bqk"}> : () -> ()
    %cst_7 = arith.constant dense<0.000000e+00> : vector<1x8x8xf32>
    %19 = tpu.matmul %14, %16, %cst_7 {dimension_numbers = #tpu.dot_dimension_numbers<[2], [2], [1], [1], [0, 0, 0, 1, 1, 1], [0], [0]>} : vector<1x8x8xf32>, vector<1x8x8xf32>, vector<1x8x8xf32> -> vector<1x8x8xf32>
    %cst_8 = arith.constant -1.000000e+30 : f32
    "tpu.trace_stop"() : () -> ()
    %20 = vector.broadcast %cst_8 : f32 to vector<1x8x8xf32>
    %21 = arith.select %10, %19, %20 : vector<1x8x8xi1>, vector<1x8x8xf32>
    %cst_9 = arith.constant dense<0xFF800000> : vector<1x8xf32>
    %22 = vector.multi_reduction <maximumf>, %21, %cst_9 [2] : vector<1x8x8xf32> to vector<1x8xf32>
    %23 = vector.shape_cast %22 : vector<1x8xf32> to vector<1x8x1xf32>
    %24 = vector.broadcast %23 : vector<1x8x1xf32> to vector<1x8x8xf32>
    %25 = arith.subf %21, %24 : vector<1x8x8xf32>
    %26 = math.exp %25 : vector<1x8x8xf32>
    %cst_10 = arith.constant dense<0.000000e+00> : vector<1x8xf32>
    %27 = vector.multi_reduction <add>, %26, %cst_10 [2] : vector<1x8x8xf32> to vector<1x8xf32>
    %28 = vector.shape_cast %27 : vector<1x8xf32> to vector<1x8x1xf32>
    %29 = tpu.reciprocal %28 : vector<1x8x1xf32> -> vector<1x8x1xf32>
    %30 = vector.broadcast %29 : vector<1x8x1xf32> to vector<1x8x8xf32>
    %31 = arith.mulf %26, %30 : vector<1x8x8xf32>
    %c0_11 = arith.constant 0 : index
    %c0_12 = arith.constant 0 : index
    %c0_13 = arith.constant 0 : index
    %c0_14 = arith.constant 0 : index
    %32 = vector.load %arg7[%c0_11, %c0_12, %c0_13, %c0_14] : memref<1x4x8x8xf32, #tpu.memory_space<vmem>>, vector<1x1x8x8xf32>
    %33 = vector.shape_cast %32 : vector<1x1x8x8xf32> to vector<1x8x8xf32>
    %34 = vector.shape_cast %31 : vector<1x8x8xf32> to vector<1x1x8x8xf32>
    tpu.vector_store %arg7[%c0_11, %c0_12, %c0_13, %c0_14], %34 {strides = array<i32>} : memref<1x4x8x8xf32, #tpu.memory_space<vmem>>, vector<1x1x8x8xf32>,
    "tpu.trace_start"() <{level = 10 : i32, message = "bqk,bkd->bqd"}> : () -> ()
    %cst_15 = arith.constant dense<0.000000e+00> : vector<1x8x8xf32>
    %35 = tpu.matmul %31, %18, %cst_15 {dimension_numbers = #tpu.dot_dimension_numbers<[2], [1], [1], [2], [0, 0, 0, 1, 1, 2], [0], [0]>} : vector<1x8x8xf32>, vector<1x8x8xf32>, vector<1x8x8xf32> -> vector<1x8x8xf32>
    "tpu.trace_stop"() : () -> ()
    %36 = vector.extract_strided_slice %6 {offsets = [0, 8], sizes = [8, 8], strides = [1, 1]} : vector<8x96xf32> to vector<8x8xf32>
    %cst_16 = arith.constant 0.353553385 : f32
    %37 = vector.broadcast %cst_16 : f32 to vector<8x8xf32>
    %38 = arith.mulf %36, %37 : vector<8x8xf32>
    %39 = vector.shape_cast %38 : vector<8x8xf32> to vector<1x8x8xf32>
    %40 = vector.extract_strided_slice %6 {offsets = [0, 40], sizes = [8, 8], strides = [1, 1]} : vector<8x96xf32> to vector<8x8xf32>
    %41 = vector.shape_cast %40 : vector<8x8xf32> to vector<1x8x8xf32>
    %42 = vector.extract_strided_slice %6 {offsets = [0, 72], sizes = [8, 8], strides = [1, 1]} : vector<8x96xf32> to vector<8x8xf32>
    %43 = vector.shape_cast %42 : vector<8x8xf32> to vector<1x8x8xf32>
    "tpu.trace_start"() <{level = 10 : i32, message = "bqd,bkd->bqk"}> : () -> ()
    %cst_17 = arith.constant dense<0.000000e+00> : vector<1x8x8xf32>
    %44 = tpu.matmul %39, %41, %cst_17 {dimension_numbers = #tpu.dot_dimension_numbers<[2], [2], [1], [1], [0, 0, 0, 1, 1, 1], [0], [0]>} : vector<1x8x8xf32>, vector<1x8x8xf32>, vector<1x8x8xf32> -> vector<1x8x8xf32>
    %cst_18 = arith.constant -1.000000e+30 : f32
    "tpu.trace_stop"() : () -> ()
    %45 = vector.broadcast %cst_18 : f32 to vector<1x8x8xf32>
    %46 = arith.select %10, %44, %45 : vector<1x8x8xi1>, vector<1x8x8xf32>
    %cst_19 = arith.constant dense<0xFF800000> : vector<1x8xf32>
    %47 = vector.multi_reduction <maximumf>, %46, %cst_19 [2] : vector<1x8x8xf32> to vector<1x8xf32>
    %48 = vector.shape_cast %47 : vector<1x8xf32> to vector<1x8x1xf32>
    %49 = vector.broadcast %48 : vector<1x8x1xf32> to vector<1x8x8xf32>
    %50 = arith.subf %46, %49 : vector<1x8x8xf32>
    %51 = math.exp %50 : vector<1x8x8xf32>
    %cst_20 = arith.constant dense<0.000000e+00> : vector<1x8xf32>
    %52 = vector.multi_reduction <add>, %51, %cst_20 [2] : vector<1x8x8xf32> to vector<1x8xf32>
    %53 = vector.shape_cast %52 : vector<1x8xf32> to vector<1x8x1xf32>
    %54 = tpu.reciprocal %53 : vector<1x8x1xf32> -> vector<1x8x1xf32>
    %55 = vector.broadcast %54 : vector<1x8x1xf32> to vector<1x8x8xf32>
    %56 = arith.mulf %51, %55 : vector<1x8x8xf32>
    %c0_21 = arith.constant 0 : index
    %c1 = arith.constant 1 : index
    %c0_22 = arith.constant 0 : index
    %c0_23 = arith.constant 0 : index
    %57 = vector.load %arg7[%c0_21, %c1, %c0_22, %c0_23] : memref<1x4x8x8xf32, #tpu.memory_space<vmem>>, vector<1x1x8x8xf32>
    %58 = vector.shape_cast %57 : vector<1x1x8x8xf32> to vector<1x8x8xf32>
    %59 = vector.shape_cast %56 : vector<1x8x8xf32> to vector<1x1x8x8xf32>
    tpu.vector_store %arg7[%c0_21, %c1, %c0_22, %c0_23], %59 {strides = array<i32>} : memref<1x4x8x8xf32, #tpu.memory_space<vmem>>, vector<1x1x8x8xf32>,
    "tpu.trace_start"() <{level = 10 : i32, message = "bqk,bkd->bqd"}> : () -> ()
    %cst_24 = arith.constant dense<0.000000e+00> : vector<1x8x8xf32>
    %60 = tpu.matmul %56, %43, %cst_24 {dimension_numbers = #tpu.dot_dimension_numbers<[2], [1], [1], [2], [0, 0, 0, 1, 1, 2], [0], [0]>} : vector<1x8x8xf32>, vector<1x8x8xf32>, vector<1x8x8xf32> -> vector<1x8x8xf32>
    "tpu.trace_stop"() : () -> ()
    %61 = vector.extract_strided_slice %6 {offsets = [0, 16], sizes = [8, 8], strides = [1, 1]} : vector<8x96xf32> to vector<8x8xf32>
    %cst_25 = arith.constant 0.353553385 : f32
    %62 = vector.broadcast %cst_25 : f32 to vector<8x8xf32>
    %63 = arith.mulf %61, %62 : vector<8x8xf32>
    %64 = vector.shape_cast %63 : vector<8x8xf32> to vector<1x8x8xf32>
    %65 = vector.extract_strided_slice %6 {offsets = [0, 48], sizes = [8, 8], strides = [1, 1]} : vector<8x96xf32> to vector<8x8xf32>
    %66 = vector.shape_cast %65 : vector<8x8xf32> to vector<1x8x8xf32>
    %67 = vector.extract_strided_slice %6 {offsets = [0, 80], sizes = [8, 8], strides = [1, 1]} : vector<8x96xf32> to vector<8x8xf32>
    %68 = vector.shape_cast %67 : vector<8x8xf32> to vector<1x8x8xf32>
    "tpu.trace_start"() <{level = 10 : i32, message = "bqd,bkd->bqk"}> : () -> ()
    %cst_26 = arith.constant dense<0.000000e+00> : vector<1x8x8xf32>
    %69 = tpu.matmul %64, %66, %cst_26 {dimension_numbers = #tpu.dot_dimension_numbers<[2], [2], [1], [1], [0, 0, 0, 1, 1, 1], [0], [0]>} : vector<1x8x8xf32>, vector<1x8x8xf32>, vector<1x8x8xf32> -> vector<1x8x8xf32>
    %cst_27 = arith.constant -1.000000e+30 : f32
    "tpu.trace_stop"() : () -> ()
    %70 = vector.broadcast %cst_27 : f32 to vector<1x8x8xf32>
    %71 = arith.select %10, %69, %70 : vector<1x8x8xi1>, vector<1x8x8xf32>
    %cst_28 = arith.constant dense<0xFF800000> : vector<1x8xf32>
    %72 = vector.multi_reduction <maximumf>, %71, %cst_28 [2] : vector<1x8x8xf32> to vector<1x8xf32>
    %73 = vector.shape_cast %72 : vector<1x8xf32> to vector<1x8x1xf32>
    %74 = vector.broadcast %73 : vector<1x8x1xf32> to vector<1x8x8xf32>
    %75 = arith.subf %71, %74 : vector<1x8x8xf32>
    %76 = math.exp %75 : vector<1x8x8xf32>
    %cst_29 = arith.constant dense<0.000000e+00> : vector<1x8xf32>
    %77 = vector.multi_reduction <add>, %76, %cst_29 [2] : vector<1x8x8xf32> to vector<1x8xf32>
    %78 = vector.shape_cast %77 : vector<1x8xf32> to vector<1x8x1xf32>
    %79 = tpu.reciprocal %78 : vector<1x8x1xf32> -> vector<1x8x1xf32>
    %80 = vector.broadcast %79 : vector<1x8x1xf32> to vector<1x8x8xf32>
    %81 = arith.mulf %76, %80 : vector<1x8x8xf32>
    %c0_30 = arith.constant 0 : index
    %c2 = arith.constant 2 : index
    %c0_31 = arith.constant 0 : index
    %c0_32 = arith.constant 0 : index
    %82 = vector.load %arg7[%c0_30, %c2, %c0_31, %c0_32] : memref<1x4x8x8xf32, #tpu.memory_space<vmem>>, vector<1x1x8x8xf32>
    %83 = vector.shape_cast %82 : vector<1x1x8x8xf32> to vector<1x8x8xf32>
    %84 = vector.shape_cast %81 : vector<1x8x8xf32> to vector<1x1x8x8xf32>
    tpu.vector_store %arg7[%c0_30, %c2, %c0_31, %c0_32], %84 {strides = array<i32>} : memref<1x4x8x8xf32, #tpu.memory_space<vmem>>, vector<1x1x8x8xf32>,
    "tpu.trace_start"() <{level = 10 : i32, message = "bqk,bkd->bqd"}> : () -> ()
    %cst_33 = arith.constant dense<0.000000e+00> : vector<1x8x8xf32>
    %85 = tpu.matmul %81, %68, %cst_33 {dimension_numbers = #tpu.dot_dimension_numbers<[2], [1], [1], [2], [0, 0, 0, 1, 1, 2], [0], [0]>} : vector<1x8x8xf32>, vector<1x8x8xf32>, vector<1x8x8xf32> -> vector<1x8x8xf32>
    "tpu.trace_stop"() : () -> ()
    %86 = vector.extract_strided_slice %6 {offsets = [0, 24], sizes = [8, 8], strides = [1, 1]} : vector<8x96xf32> to vector<8x8xf32>
    %cst_34 = arith.constant 0.353553385 : f32
    %87 = vector.broadcast %cst_34 : f32 to vector<8x8xf32>
    %88 = arith.mulf %86, %87 : vector<8x8xf32>
    %89 = vector.shape_cast %88 : vector<8x8xf32> to vector<1x8x8xf32>
    %90 = vector.extract_strided_slice %6 {offsets = [0, 56], sizes = [8, 8], strides = [1, 1]} : vector<8x96xf32> to vector<8x8xf32>
    %91 = vector.shape_cast %90 : vector<8x8xf32> to vector<1x8x8xf32>
    %92 = vector.extract_strided_slice %6 {offsets = [0, 88], sizes = [8, 8], strides = [1, 1]} : vector<8x96xf32> to vector<8x8xf32>
    %93 = vector.shape_cast %92 : vector<8x8xf32> to vector<1x8x8xf32>
    "tpu.trace_start"() <{level = 10 : i32, message = "bqd,bkd->bqk"}> : () -> ()
    %cst_35 = arith.constant dense<0.000000e+00> : vector<1x8x8xf32>
    %94 = tpu.matmul %89, %91, %cst_35 {dimension_numbers = #tpu.dot_dimension_numbers<[2], [2], [1], [1], [0, 0, 0, 1, 1, 1], [0], [0]>} : vector<1x8x8xf32>, vector<1x8x8xf32>, vector<1x8x8xf32> -> vector<1x8x8xf32>
    %cst_36 = arith.constant -1.000000e+30 : f32
    "tpu.trace_stop"() : () -> ()
    %95 = vector.broadcast %cst_36 : f32 to vector<1x8x8xf32>
    %96 = arith.select %10, %94, %95 : vector<1x8x8xi1>, vector<1x8x8xf32>
    %cst_37 = arith.constant dense<0xFF800000> : vector<1x8xf32>
    %97 = vector.multi_reduction <maximumf>, %96, %cst_37 [2] : vector<1x8x8xf32> to vector<1x8xf32>
    %98 = vector.shape_cast %97 : vector<1x8xf32> to vector<1x8x1xf32>
    %99 = vector.broadcast %98 : vector<1x8x1xf32> to vector<1x8x8xf32>
    %100 = arith.subf %96, %99 : vector<1x8x8xf32>
    %101 = math.exp %100 : vector<1x8x8xf32>
    %cst_38 = arith.constant dense<0.000000e+00> : vector<1x8xf32>
    %102 = vector.multi_reduction <add>, %101, %cst_38 [2] : vector<1x8x8xf32> to vector<1x8xf32>
    %103 = vector.shape_cast %102 : vector<1x8xf32> to vector<1x8x1xf32>
    %104 = tpu.reciprocal %103 : vector<1x8x1xf32> -> vector<1x8x1xf32>
    %105 = vector.broadcast %104 : vector<1x8x1xf32> to vector<1x8x8xf32>
    %106 = arith.mulf %101, %105 : vector<1x8x8xf32>
    %c0_39 = arith.constant 0 : index
    %c3 = arith.constant 3 : index
    %c0_40 = arith.constant 0 : index
    %c0_41 = arith.constant 0 : index
    %107 = vector.load %arg7[%c0_39, %c3, %c0_40, %c0_41] : memref<1x4x8x8xf32, #tpu.memory_space<vmem>>, vector<1x1x8x8xf32>
    %108 = vector.shape_cast %107 : vector<1x1x8x8xf32> to vector<1x8x8xf32>
    %109 = vector.shape_cast %106 : vector<1x8x8xf32> to vector<1x1x8x8xf32>
    tpu.vector_store %arg7[%c0_39, %c3, %c0_40, %c0_41], %109 {strides = array<i32>} : memref<1x4x8x8xf32, #tpu.memory_space<vmem>>, vector<1x1x8x8xf32>,
    "tpu.trace_start"() <{level = 10 : i32, message = "bqk,bkd->bqd"}> : () -> ()
    %cst_42 = arith.constant dense<0.000000e+00> : vector<1x8x8xf32>
    %110 = tpu.matmul %106, %93, %cst_42 {dimension_numbers = #tpu.dot_dimension_numbers<[2], [1], [1], [2], [0, 0, 0, 1, 1, 2], [0], [0]>} : vector<1x8x8xf32>, vector<1x8x8xf32>, vector<1x8x8xf32> -> vector<1x8x8xf32>
    "tpu.trace_stop"() : () -> ()
    %111 = tpu.concatenate %35, %60, %85, %110 in 2 : vector<1x8x8xf32>, vector<1x8x8xf32>, vector<1x8x8xf32>, vector<1x8x8xf32> -> vector<1x8x32xf32>
    %112 = vector.shape_cast %111 : vector<1x8x32xf32> to vector<8x32xf32>
    %c0_43 = arith.constant 0 : index
    %c0_44 = arith.constant 0 : index
    %113 = vector.load %arg4[%c0_43, %c0_44] : memref<32x32xf32, #tpu.memory_space<vmem>>, vector<32x32xf32>
    %cst_45 = arith.constant dense<0.000000e+00> : vector<8x32xf32>
    %114 = tpu.matmul %112, %113, %cst_45 {dimension_numbers = #tpu.dot_dimension_numbers<[1], [0], [0], [1], [0, 0, 1, 1], [], []>} : vector<8x32xf32>, vector<32x32xf32>, vector<8x32xf32> -> vector<8x32xf32>
    %c0_46 = arith.constant 0 : index
    %c0_47 = arith.constant 0 : index
    %115 = vector.load %arg5[%c0_46, %c0_47] : memref<1x32xf32, #tpu.memory_space<vmem>>, vector<1x32xf32>
    %116 = vector.broadcast %115 : vector<1x32xf32> to vector<8x32xf32>
    %117 = arith.addf %114, %116 : vector<8x32xf32>
    %118 = vector.shape_cast %117 : vector<8x32xf32> to vector<1x8x32xf32>
    %c0_48 = arith.constant 0 : index
    %c0_49 = arith.constant 0 : index
    %c0_50 = arith.constant 0 : index
    %119 = vector.load %arg6[%c0_48, %c0_49, %c0_50] : memref<1x8x32xf32, #tpu.memory_space<vmem>>, vector<1x8x32xf32>
    tpu.vector_store %arg6[%c0_48, %c0_49, %c0_50], %118 {strides = array<i32>} : memref<1x8x32xf32, #tpu.memory_space<vmem>>, vector<1x8x32xf32>,
    return
  }
  func.func @transform_0(%arg0: i32) -> (i32, i32, i32) {
    %c0_i32 = arith.constant 0 : i32
    %c0_i32_0 = arith.constant 0 : i32
    %c0_i32_1 = arith.constant 0 : i32
    return %arg0, %c0_i32, %c0_i32_0 : i32, i32, i32
  }
  func.func @transform_1(%arg0: i32) -> (i32, i32) {
    %c0_i32 = arith.constant 0 : i32
    %c0_i32_0 = arith.constant 0 : i32
    %c0_i32_1 = arith.constant 0 : i32
    return %c0_i32, %c0_i32_0 : i32, i32
  }
  func.func @transform_2(%arg0: i32) -> (i32, i32) {
    %c0_i32 = arith.constant 0 : i32
    %c0_i32_0 = arith.constant 0 : i32
    %c0_i32_1 = arith.constant 0 : i32
    return %c0_i32, %c0_i32_0 : i32, i32
  }
  func.func @transform_3(%arg0: i32) -> (i32, i32) {
    %c0_i32 = arith.constant 0 : i32
    %c0_i32_0 = arith.constant 0 : i32
    %c0_i32_1 = arith.constant 0 : i32
    return %c0_i32, %c0_i32_0 : i32, i32
  }
  func.func @transform_4(%arg0: i32) -> (i32, i32) {
    %c0_i32 = arith.constant 0 : i32
    %c0_i32_0 = arith.constant 0 : i32
    %c0_i32_1 = arith.constant 0 : i32
    return %c0_i32, %c0_i32_0 : i32, i32
  }
  func.func @transform_5(%arg0: i32) -> (i32, i32, i32) {
    %c0_i32 = arith.constant 0 : i32
    %c0_i32_0 = arith.constant 0 : i32
    %c0_i32_1 = arith.constant 0 : i32
    return %arg0, %c0_i32, %c0_i32_0 : i32, i32, i32
  }
  func.func @transform_6(%arg0: i32) -> (i32, i32, i32, i32) {
    %c0_i32 = arith.constant 0 : i32
    %c0_i32_0 = arith.constant 0 : i32
    %c0_i32_1 = arith.constant 0 : i32
    %c0_i32_2 = arith.constant 0 : i32
    return %arg0, %c0_i32, %c0_i32_0, %c0_i32_1 : i32, i32, i32, i32
  }
}

</mosaic_0001>

<llo_original>
// kernel: tpu_custom_call.1
$region0: #{tpu_custom_call.1}
  #allocation0 [shape = 'u32[]', space=smem, size = 0x4, offset = 0x4, fixed_abs, tag = 'smem constant byte address 0x4 - core index']
  #allocation1 [shape = 'u32[144,128]{1,0:T(1,128)}', space=vmem, size = 0x12000, scoped, tag = 'internal scratch']
  %s0 = inlined_call_operand.hbm [shape: f32[2,8,32], index: 0, kind: input, shape index: {}]
  %s1 = inlined_call_operand.hbm [shape: f32[32,96], index: 1, kind: input, shape index: {}]
  %s2 = inlined_call_operand.vmem [shape: f32[1,96], index: 2, kind: input, shape index: {}]
  %s3 = inlined_call_operand.hbm [shape: f32[32,32], index: 3, kind: input, shape index: {}]
  %s4 = inlined_call_operand.vmem [shape: f32[1,32], index: 4, kind: input, shape index: {}]
  %s5 = inlined_call_operand.hbm [shape: f32[2,8,32], index: 5, kind: output, shape index: {0}]
  %s6 = inlined_call_operand.hbm [shape: f32[2,4,8,8], index: 6, kind: output, shape index: {1}]
  %7 = xla_tuple %s5, %s6
  %s8 = sld [smem:[#allocation0]]
  $region73: #{tpu_custom_call.1} parent=0
    _
  %s10 = ssub.s32 1, %s8
  %s11 = scalar_select 0, %s10, %s8
  $region1: #{tpu_custom_call.1} parent=0
    #allocation2 [shape = 'u8[8192]{0}', space=vmem, size = 0x2000, scoped, tag = 'input window, operand 0']
    #allocation3 [shape = 's32[2]{0}', space=sflag, size = 0x8, scoped, tag = 'scoped memory for tpu_custom_call.1']
    #allocation4 [shape = 's32[2]{0}', space=sflag, size = 0x8, scoped, tag = 'scoped memory for tpu_custom_call.1']
    #allocation5 [shape = 'u8[16384]{0}', space=vmem, size = 0x4000, scoped, tag = 'input window, operand 1, single buffered']
    #allocation6 [shape = 's32[1]{0}', space=sflag, size = 0x4, scoped, tag = 'scoped memory for tpu_custom_call.1']
    #allocation7 [shape = 'u8[16384]{0}', space=vmem, size = 0x4000, scoped, tag = 'input window, operand 3, single buffered']
    #allocation8 [shape = 'u8[8192]{0}', space=vmem, size = 0x2000, scoped, tag = 'output window, operand 0']
    #allocation9 [shape = 'u8[32768]{0}', space=vmem, size = 0x8000, scoped, tag = 'output window, operand 1']
    #allocation10 [shape = 's32[2]{0}', space=sflag, size = 0x8, scoped, tag = 'scoped memory for tpu_custom_call.1']
    %12 = vsyncpa [#allocation3], 0
    %s13 = scalar_lea.sflag [#allocation3], 1
    %14 = vsyncpa %s13, 0
    %15 = vsyncpa [#allocation6], 0
    %16 = vsyncpa [#allocation4], 0
    %s17 = scalar_lea.sflag [#allocation4], 1
    %18 = vsyncpa %s17, 0
    %19 = vsyncpa [#allocation10], 0
    %s20 = scalar_lea.sflag [#allocation10], 1
    %21 = vsyncpa %s20, 0
    loop: start=0, step=1, limit=4
    $region2: #{tpu_custom_call.1} parent=1 // loop_pre_header
      _
    $region3: #{tpu_custom_call.1} parent=1 // loop_header
      %s23 = sphi 0, %s27
      %p24 = scmp.ge.s32.totalorder %s23, 4
      %s33 = sphi 0, %s35
      %s36 = sphi 0, %s33
      %s37 = sphi 0, %s36
      %s53 = sphi 0, %s37
      %s57 = sphi 0, %s57
      %s59 = sphi 0, %s57
      %s60 = sphi 0, %s59
      %s74 = sphi 0, %s60
      %s78 = sphi 0, %s78
      %s80 = sphi 0, %s78
      %s81 = sphi 0, %s80
      %s95 = sphi 0, %s81
      %s99 = sphi 0, %s99
      %s101 = sphi 0, %s99
      %s102 = sphi 0, %s101
      %s116 = sphi 0, %s102
      %s120 = sphi 0, %s120
      %s122 = sphi 0, %s120
      %s123 = sphi 0, %s122
      %s137 = sphi 0, %s123
      %s143 = sphi 0, %s145
      %s146 = sphi 0, %s143
      %s147 = sphi 0, %s146
      %s163 = sphi 0, %s147
      %s169 = sphi 0, %s171
      %s172 = sphi 0, %s169
      %s173 = sphi 0, %s172
      %s189 = sphi 0, %s173
    $region4: #{tpu_custom_call.1} parent=1 // loop_header_branch
      %26 = sbr.rel (%p24) target = $region8
    $region5: #{tpu_custom_call.1} parent=1 // loop_body
      %s28 = ssub.s32 %s23, 1
      %s29 = ssub.s32 %s23, 2
      %s30 = sadd.s32 %s23, 1
      %s31 = ssub.s32 %s23, %s30
      %p32 = scmp.eq.s32.totalorder %s31, 0
      %s34 = sadd.s32 %s33, 1
      %s35 = scalar_select %p32, %s33, %s34
      %p38 = pneg %p32
      %p39 = scmp.eq.s32.totalorder %s23, 1
      %p40 = por %p38, %p39
      %p41 = scmp.ne.s32.totalorder %s33, %s36
      %p42 = scmp.eq.s32.totalorder %s23, 0
      %p43 = por %p41, %p42
      %p44 = scmp.ne.s32.totalorder %s33, %s36
      %p45 = scmp.eq.s32.totalorder %s28, 1
      %p46 = por %p44, %p45
      %p47 = scmp.ne.s32.totalorder %s36, %s37
      %p48 = scmp.eq.s32.totalorder %s28, 0
      %p49 = por %p47, %p48
      %p50 = scmp.ne.s32.totalorder %s36, %s37
      %p51 = scmp.eq.s32.totalorder %s29, 1
      %p52 = por %p50, %p51
      %p54 = scmp.ne.s32.totalorder %s37, %s53
      %p55 = scmp.eq.s32.totalorder %s29, 0
      %p56 = por %p54, %p55
      %s58 = sadd.s32 %s57, 1
      %p61 = scmp.eq.s32.totalorder %s23, 1
      %p62 = scmp.ne.s32.totalorder %s57, %s59
      %p63 = scmp.eq.s32.totalorder %s23, 0
      %p64 = por %p62, %p63
      %p65 = scmp.ne.s32.totalorder %s57, %s59
      %p66 = scmp.eq.s32.totalorder %s28, 1
      %p67 = por %p65, %p66
      %p68 = scmp.ne.s32.totalorder %s59, %s60
      %p69 = scmp.eq.s32.totalorder %s28, 0
      %p70 = por %p68, %p69
      %p71 = scmp.ne.s32.totalorder %s59, %s60
      %p72 = scmp.eq.s32.totalorder %s29, 1
      %p73 = por %p71, %p72
      %p75 = scmp.ne.s32.totalorder %s60, %s74
      %p76 = scmp.eq.s32.totalorder %s29, 0
      %p77 = por %p75, %p76
      %s79 = sadd.s32 %s78, 1
      %p82 = scmp.eq.s32.totalorder %s23, 1
      %p83 = scmp.ne.s32.totalorder %s78, %s80
      %p84 = scmp.eq.s32.totalorder %s23, 0
      %p85 = por %p83, %p84
      %p86 = scmp.ne.s32.totalorder %s78, %s80
      %p87 = scmp.eq.s32.totalorder %s28, 1
      %p88 = por %p86, %p87
      %p89 = scmp.ne.s32.totalorder %s80, %s81
      %p90 = scmp.eq.s32.totalorder %s28, 0
      %p91 = por %p89, %p90
      %p92 = scmp.ne.s32.totalorder %s80, %s81
      %p93 = scmp.eq.s32.totalorder %s29, 1
      %p94 = por %p92, %p93
      %p96 = scmp.ne.s32.totalorder %s81, %s95
      %p97 = scmp.eq.s32.totalorder %s29, 0
      %p98 = por %p96, %p97
      %s100 = sadd.s32 %s99, 1
      %p103 = scmp.eq.s32.totalorder %s23, 1
      %p104 = scmp.ne.s32.totalorder %s99, %s101
      %p105 = scmp.eq.s32.totalorder %s23, 0
      %p106 = por %p104, %p105
      %p107 = scmp.ne.s32.totalorder %s99, %s101
      %p108 = scmp.eq.s32.totalorder %s28, 1
      %p109 = por %p107, %p108
      %p110 = scmp.ne.s32.totalorder %s101, %s102
      %p111 = scmp.eq.s32.totalorder %s28, 0
      %p112 = por %p110, %p111
      %p113 = scmp.ne.s32.totalorder %s101, %s102
      %p114 = scmp.eq.s32.totalorder %s29, 1
      %p115 = por %p113, %p114
      %p117 = scmp.ne.s32.totalorder %s102, %s116
      %p118 = scmp.eq.s32.totalorder %s29, 0
      %p119 = por %p117, %p118
      %s121 = sadd.s32 %s120, 1
      %p124 = scmp.eq.s32.totalorder %s23, 1
      %p125 = scmp.ne.s32.totalorder %s120, %s122
      %p126 = scmp.eq.s32.totalorder %s23, 0
      %p127 = por %p125, %p126
      %p128 = scmp.ne.s32.totalorder %s120, %s122
      %p129 = scmp.eq.s32.totalorder %s28, 1
      %p130 = por %p128, %p129
      %p131 = scmp.ne.s32.totalorder %s122, %s123
      %p132 = scmp.eq.s32.totalorder %s28, 0
      %p133 = por %p131, %p132
      %p134 = scmp.ne.s32.totalorder %s122, %s123
      %p135 = scmp.eq.s32.totalorder %s29, 1
      %p136 = por %p134, %p135
      %p138 = scmp.ne.s32.totalorder %s123, %s137
      %p139 = scmp.eq.s32.totalorder %s29, 0
      %p140 = por %p138, %p139
      %s141 = ssub.s32 %s23, %s30
      %p142 = scmp.eq.s32.totalorder %s141, 0
      %s144 = sadd.s32 %s143, 1
      %s145 = scalar_select %p142, %s143, %s144
      %p148 = pneg %p142
      %p149 = scmp.eq.s32.totalorder %s23, 1
      %p150 = por %p148, %p149
      %p151 = scmp.ne.s32.totalorder %s143, %s146
      %p152 = scmp.eq.s32.totalorder %s23, 0
      %p153 = por %p151, %p152
      %p154 = scmp.ne.s32.totalorder %s143, %s146
      %p155 = scmp.eq.s32.totalorder %s28, 1
      %p156 = por %p154, %p155
      %p157 = scmp.ne.s32.totalorder %s146, %s147
      %p158 = scmp.eq.s32.totalorder %s28, 0
      %p159 = por %p157, %p158
      %p160 = scmp.ne.s32.totalorder %s146, %s147
      %p161 = scmp.eq.s32.totalorder %s29, 1
      %p162 = por %p160, %p161
      %p164 = scmp.ne.s32.totalorder %s147, %s163
      %p165 = scmp.eq.s32.totalorder %s29, 0
      %p166 = por %p164, %p165
      %s167 = ssub.s32 %s23, %s30
      %p168 = scmp.eq.s32.totalorder %s167, 0
      %s170 = sadd.s32 %s169, 1
      %s171 = scalar_select %p168, %s169, %s170
      %p174 = pneg %p168
      %p175 = scmp.eq.s32.totalorder %s23, 1
      %p176 = por %p174, %p175
      %p177 = scmp.ne.s32.totalorder %s169, %s172
      %p178 = scmp.eq.s32.totalorder %s23, 0
      %p179 = por %p177, %p178
      %p180 = scmp.ne.s32.totalorder %s169, %s172
      %p181 = scmp.eq.s32.totalorder %s28, 1
      %p182 = por %p180, %p181
      %p183 = scmp.ne.s32.totalorder %s172, %s173
      %p184 = scmp.eq.s32.totalorder %s28, 0
      %p185 = por %p183, %p184
      %p186 = scmp.ne.s32.totalorder %s172, %s173
      %p187 = scmp.eq.s32.totalorder %s29, 1
      %p188 = por %p186, %p187
      %p190 = scmp.ne.s32.totalorder %s173, %s189
      %p191 = scmp.eq.s32.totalorder %s29, 0
      %p192 = por %p190, %p191
      %p193 = scmp.le.s32.totalorder 1, %s23
      %p194 = scmp.lt.s32.totalorder %s23, 3
      %p195 = pnand %p193, %p194
      %p196 = pneg %p195
      // Predicated region
      $region9: #{tpu_custom_call.1} parent=5 // pred_check
        _
      $region10: #{tpu_custom_call.1} parent=5 // pred_check_branch
        %198 = sbr.rel (%p195) target = $region12
      $region11: #{tpu_custom_call.1} parent=5 // pred_region
        %s199 = ssub.s32 %s23, 1
        // Predicated region
        $region13: #{tpu_custom_call.1} parent=11 // pred_check
          %p200 = pneg %p70
        $region14: #{tpu_custom_call.1} parent=11 // pred_check_branch
          %202 = sbr.rel (%p200) target = $region16
        $region15: #{tpu_custom_call.1} parent=11 // pred_region
          %s204 = ssub.s32 512, 512
          %205 = vsyncadd [#allocation6], %s204
          %s206 = sshll.u32 [#allocation5], 4
          %s207 = int_to_ptr.vmem [resolvable:$true] %s206
          %212 = dma.hbm_to_vmem [thread:$0]  %s1, 512, %s207, [#allocation6], 128, 128, 8
        $region16: #{tpu_custom_call.1} parent=11 // pred_fallthru
          _
        // Predicated region
        $region17: #{tpu_custom_call.1} parent=11 // pred_check
          %p213 = pneg %p91
        $region18: #{tpu_custom_call.1} parent=11 // pred_check_branch
          %215 = sbr.rel (%p213) target = $region20
        $region19: #{tpu_custom_call.1} parent=11 // pred_region
          _
        $region20: #{tpu_custom_call.1} parent=11 // pred_fallthru
          _
        // Predicated region
        $region21: #{tpu_custom_call.1} parent=11 // pred_check
          %p216 = pneg %p112
        $region22: #{tpu_custom_call.1} parent=11 // pred_check_branch
          %218 = sbr.rel (%p216) target = $region24
        $region23: #{tpu_custom_call.1} parent=11 // pred_region
          %s220 = ssub.s32 512, 512
          %221 = vsyncadd [#allocation6], %s220
          %s222 = sshll.u32 [#allocation7], 4
          %s223 = int_to_ptr.vmem [resolvable:$true] %s222
          %228 = dma.hbm_to_vmem [thread:$0]  %s3, 512, %s223, [#allocation6], 128, 128, 8
        $region24: #{tpu_custom_call.1} parent=11 // pred_fallthru
          _
        // Predicated region
        $region25: #{tpu_custom_call.1} parent=11 // pred_check
          %p229 = pneg %p133
        $region26: #{tpu_custom_call.1} parent=11 // pred_check_branch
          %231 = sbr.rel (%p229) target = $region28
        $region27: #{tpu_custom_call.1} parent=11 // pred_region
          _
        $region28: #{tpu_custom_call.1} parent=11 // pred_fallthru
          _
      $region12: #{tpu_custom_call.1} parent=5 // pred_fallthru
        _
      %p232 = scmp.lt.s32.totalorder %s23, 2
      // Predicated region
      $region29: #{tpu_custom_call.1} parent=5 // pred_check
        %p233 = pneg %p232
      $region30: #{tpu_custom_call.1} parent=5 // pred_check_branch
        %235 = sbr.rel (%p233) target = $region32
      $region31: #{tpu_custom_call.1} parent=5 // pred_region
        // Predicated region
        $region33: #{tpu_custom_call.1} parent=31 // pred_check
          %p236 = pneg %p43
        $region34: #{tpu_custom_call.1} parent=31 // pred_check_branch
          %238 = sbr.rel (%p236) target = $region36
        $region35: #{tpu_custom_call.1} parent=31 // pred_region
          %s239 = sand.u32 %s33, 1
          %s240 = scalar_lea.sflag [#allocation3], %s239
          %s241 = sand.u32 %s33, 1
          %s242 = smul.addr %s241, 8
          %s243 = scalar_lea.vmem [#allocation2], %s242
          %s245 = ssub.s32 128, 128
          %246 = vsyncadd %s240, %s245
          %s247 = smul.addr %s23, 128
          %s248 = scalar_lea.hbm %s0, %s247
          %s250 = sshll.u32 %s243, 4
          %s251 = int_to_ptr.vmem [resolvable:$true] %s250
          %253 = dma.hbm_to_vmem [thread:$0]  %s248, 128, %s251, %s240
        $region36: #{tpu_custom_call.1} parent=31 // pred_fallthru
          _
      $region32: #{tpu_custom_call.1} parent=5 // pred_fallthru
        _
      %p254 = scmp.le.s32.totalorder 1, %s23
      %p255 = scmp.lt.s32.totalorder %s23, 3
      %p256 = pnand %p254, %p255
      %p257 = pneg %p256
      // Predicated region
      $region37: #{tpu_custom_call.1} parent=5 // pred_check
        _
      $region38: #{tpu_custom_call.1} parent=5 // pred_check_branch
        %259 = sbr.rel (%p256) target = $region40
      $region39: #{tpu_custom_call.1} parent=5 // pred_region
        %s260 = ssub.s32 %s23, 1
        %s261 = sand.u32 %s36, 1
        %s262 = scalar_lea.sflag [#allocation3], %s261
        %s263 = sand.u32 %s36, 1
        %s264 = smul.addr %s263, 8
        %s265 = scalar_lea.vmem [#allocation2], %s264
        // Predicated region
        $region41: #{tpu_custom_call.1} parent=39 // pred_check
          %p266 = pneg %p49
        $region42: #{tpu_custom_call.1} parent=39 // pred_check_branch
          %268 = sbr.rel (%p266) target = $region44
        $region43: #{tpu_custom_call.1} parent=39 // pred_region
          %269 = dma.done %s262, 128
        $region44: #{tpu_custom_call.1} parent=39 // pred_fallthru
          _
        // Predicated region
        $region45: #{tpu_custom_call.1} parent=39 // pred_check
          %p270 = pneg %p70
        $region46: #{tpu_custom_call.1} parent=39 // pred_check_branch
          %272 = sbr.rel (%p270) target = $region48
        $region47: #{tpu_custom_call.1} parent=39 // pred_region
          %273 = dma.done [#allocation6], 512
        $region48: #{tpu_custom_call.1} parent=39 // pred_fallthru
          _
        // Predicated region
        $region49: #{tpu_custom_call.1} parent=39 // pred_check
          %p274 = pneg %p112
        $region50: #{tpu_custom_call.1} parent=39 // pred_check_branch
          %276 = sbr.rel (%p274) target = $region52
        $region51: #{tpu_custom_call.1} parent=39 // pred_region
          %277 = dma.done [#allocation6], 512
        $region52: #{tpu_custom_call.1} parent=39 // pred_fallthru
          _
        %s278 = sand.u32 %s36, 1
        %s279 = scalar_lea.sflag [#allocation3], %s278
        %s280 = sand.u32 %s36, 1
        %s281 = smul.addr %s280, 8
        %s282 = scalar_lea.vmem [#allocation2], %s281
        %p283 = pneg %p49
        %p284 = pneg %p46
        %p285 = pneg %p70
        %p286 = pneg %p67
        %p287 = pneg %p91
        %p288 = pneg %p88
        %p289 = pneg %p112
        %p290 = pneg %p109
        %p291 = pneg %p133
        %p292 = pneg %p130
        %p293 = pneg %p159
        %p294 = pneg %p156
        %s295 = sand.u32 %s146, 1
        %s296 = scalar_lea.sflag [#allocation4], %s295
        %s297 = sand.u32 %s146, 1
        %s298 = smul.addr %s297, 8
        %s299 = scalar_lea.vmem [#allocation8], %s298
        %p300 = pneg %p185
        %p301 = pneg %p182
        %s302 = sand.u32 %s172, 1
        %s303 = scalar_lea.sflag [#allocation10], %s302
        %s304 = sand.u32 %s172, 1
        %s305 = smul.addr %s304, 32
        %s306 = scalar_lea.vmem [#allocation9], %s305
        %v307 = vld [vmem:[%s265] sm:$0xff]
        %v308 = vld [vmem:[#allocation5] sm:$0xff]
        %v309 = vld [vmem:[#allocation5 + $0x8] sm:$0xff]
        %v310 = vld [vmem:[#allocation5 + $0x10] sm:$0xff]
        %v311 = vld [vmem:[#allocation5 + $0x18] sm:$0xff]
        %v312 = vld [vmem:[%s2] sm:$0x1]
        %v314 = vlaneseq
        %v315 = vshrl.u32 %v314, 7
        %v316 = vsub.s32 0, %v315
        %v317 = vrot.slane %v312, %v316
        %vm319 = vcmask 261120
        %v321 = vsel %vm319, %v307, 0
        %323 = vmatprep.subr.mxu0 0.0
        %324 = vmatpush1.msra.mxu0 %v308
        %325 = vmatprep.subr.mxu0 0.0
        %326 = vmatpush1.msra.mxu0 %v309
        %327 = vmatprep.subr.mxu0 0.0
        %328 = vmatpush1.msra.mxu0 %v310
        %329 = vmatprep.subr.mxu0 0.0
        %330 = vmatpush1.msra.mxu0 %v311
        %331 = vmatprep.subr.mxu0 0.0
        %332 = vmatpush1.msra.mxu0 0.0
        %333 = vmatprep.subr.mxu0 0.0
        %334 = vmatpush1.msra.mxu0 0.0
        %335 = vmatprep.subr.mxu0 0.0
        %336 = vmatpush1.msra.mxu0 0.0
        %337 = vmatprep.subr.mxu0 0.0
        %338 = vmatpush1.msra.mxu0 0.0
        %339 = vmatprep.subr.mxu0 0.0
        %340 = vmatpush1.msra.mxu0 0.0
        %341 = vmatprep.subr.mxu0 0.0
        %342 = vmatpush1.msra.mxu0 0.0
        %343 = vmatprep.subr.mxu0 0.0
        %344 = vmatpush1.msra.mxu0 0.0
        %345 = vmatprep.subr.mxu0 0.0
        %346 = vmatpush1.msra.mxu0 0.0
        %347 = vmatprep.subr.mxu0 0.0
        %348 = vmatpush1.msra.mxu0 0.0
        %349 = vmatprep.subr.mxu0 0.0
        %350 = vmatpush1.msra.mxu0 0.0
        %351 = vmatprep.subr.mxu0 0.0
        %352 = vmatpush1.msra.mxu0 0.0
        %353 = vmatprep.subr.mxu0 0.0
        %354 = vmatpush1.msra.mxu0 0.0
        %355 = vmatprep.subr.mxu0 0.0
        %356 = vmatpush1.msra.mxu0 0.0
        %357 = vmatprep.subr.mxu0 0.0
        %358 = vmatpush1.msra.mxu0 0.0
        %359 = vmatprep.subr.mxu0 0.0
        %360 = vmatpush1.msra.mxu0 0.0
        %361 = vmatprep.subr.mxu0 0.0
        %362 = vmatpush1.msra.mxu0 0.0
        %363 = vmatprep.subr.mxu0 0.0
        %364 = vmatpush1.msra.mxu0 0.0
        %365 = vmatprep.subr.mxu0 0.0
        %366 = vmatpush1.msra.mxu0 0.0
        %367 = vmatprep.subr.mxu0 0.0
        %368 = vmatpush1.msra.mxu0 0.0
        %369 = vmatprep.subr.mxu0 0.0
        %370 = vmatpush1.msra.mxu0 0.0
        %371 = vmatprep.subr.mxu0 0.0
        %372 = vmatpush1.msra.mxu0 0.0
        %373 = vmatprep.subr.mxu0 0.0
        %374 = vmatpush1.msra.mxu0 0.0
        %375 = vmatprep.subr.mxu0 0.0
        %376 = vmatpush1.msra.mxu0 0.0
        %377 = vmatprep.subr.mxu0 0.0
        %378 = vmatpush1.msra.mxu0 0.0
        %379 = vmatprep.subr.mxu0 0.0
        %380 = vmatpush1.msra.mxu0 0.0
        %381 = vmatprep.subr.mxu0 0.0
        %382 = vmatpush1.msra.mxu0 0.0
        %383 = vmatprep.subr.mxu0 0.0
        %384 = vmatpush1.msra.mxu0 0.0
        %385 = vmatprep.subr.mxu0 0.0
        %386 = vmatpush1.msra.mxu0 0.0
        %387 = vmatprep.mubr.f32.mxu0 0.0
        %388 = vmatmul.mubr.f32.gmra.mrb[0].mxu0 %v321
        %v389 = vpop.f32.mrb[0].mxu0
        %v390 = vadd.f32 %v317, %v389
        %v391 = vpop.f32.mrb[0].mxu0
        %392 = vdwg.mxu0
        %v393 = vlaneseq
        %v394 = vshrl.u32 %v393, 7
        %v395 = vlaneseq
        %v396 = vand.u32 %v395, 127
        %vm397 = vcmp.ge.s32.totalorder %v394, %v396
        %v398 = vmul.f32 %v390, 0.35355338
        %400 = vrot.lane.b32.xlu0 %v390, 96
        %v401 = vpop.permute.xlu0 %400
        %vm402 = vcmask 64512
        %v404 = vsel %vm402, %v398, 0
        %v406 = vsel %vm402, %v401, 0
        %408 = vmatprep.subr.mxu0 0.0
        %409 = vmatpush1.xpose.msra.mxu0 %v406
        %410 = vmatprep.subr.mxu0 0.0
        %411 = vmatpush1.xpose.msra.mxu0 0.0
        %412 = vmatprep.subr.mxu0 0.0
        %413 = vmatpush1.xpose.msra.mxu0 0.0
        %414 = vmatprep.subr.mxu0 0.0
        %415 = vmatpush1.xpose.msra.mxu0 0.0
        %416 = vmatprep.subr.mxu0 0.0
        %417 = vmatpush1.xpose.msra.mxu0 0.0
        %418 = vmatprep.subr.mxu0 0.0
        %419 = vmatpush1.xpose.msra.mxu0 0.0
        %420 = vmatprep.subr.mxu0 0.0
        %421 = vmatpush1.xpose.msra.mxu0 0.0
        %422 = vmatprep.subr.mxu0 0.0
        %423 = vmatpush1.xpose.msra.mxu0 0.0
        %424 = vmatprep.subr.mxu0 0.0
        %425 = vmatpush1.xpose.msra.mxu0 0.0
        %426 = vmatprep.subr.mxu0 0.0
        %427 = vmatpush1.xpose.msra.mxu0 0.0
        %428 = vmatprep.subr.mxu0 0.0
        %429 = vmatpush1.xpose.msra.mxu0 0.0
        %430 = vmatprep.subr.mxu0 0.0
        %431 = vmatpush1.xpose.msra.mxu0 0.0
        %432 = vmatprep.subr.mxu0 0.0
        %433 = vmatpush1.xpose.msra.mxu0 0.0
        %434 = vmatprep.subr.mxu0 0.0
        %435 = vmatpush1.xpose.msra.mxu0 0.0
        %436 = vmatprep.subr.mxu0 0.0
        %437 = vmatpush1.xpose.msra.mxu0 0.0
        %438 = vmatprep.subr.mxu0 0.0
        %439 = vmatpush1.xpose.msra.mxu0 0.0
        %440 = vmatprep.subr.mxu0 0.0
        %441 = vmatpush1.xpose.msra.mxu0 0.0
        %442 = vmatprep.subr.mxu0 0.0
        %443 = vmatpush1.xpose.msra.mxu0 0.0
        %444 = vmatprep.subr.mxu0 0.0
        %445 = vmatpush1.xpose.msra.mxu0 0.0
        %446 = vmatprep.subr.mxu0 0.0
        %447 = vmatpush1.xpose.msra.mxu0 0.0
        %448 = vmatprep.subr.mxu0 0.0
        %449 = vmatpush1.xpose.msra.mxu0 0.0
        %450 = vmatprep.subr.mxu0 0.0
        %451 = vmatpush1.xpose.msra.mxu0 0.0
        %452 = vmatprep.subr.mxu0 0.0
        %453 = vmatpush1.xpose.msra.mxu0 0.0
        %454 = vmatprep.subr.mxu0 0.0
        %455 = vmatpush1.xpose.msra.mxu0 0.0
        %456 = vmatprep.subr.mxu0 0.0
        %457 = vmatpush1.xpose.msra.mxu0 0.0
        %458 = vmatprep.subr.mxu0 0.0
        %459 = vmatpush1.xpose.msra.mxu0 0.0
        %460 = vmatprep.subr.mxu0 0.0
        %461 = vmatpush1.xpose.msra.mxu0 0.0
        %462 = vmatprep.subr.mxu0 0.0
        %463 = vmatpush1.xpose.msra.mxu0 0.0
        %464 = vmatprep.subr.mxu0 0.0
        %465 = vmatpush1.xpose.msra.mxu0 0.0
        %466 = vmatprep.subr.mxu0 0.0
        %467 = vmatpush1.xpose.msra.mxu0 0.0
        %468 = vmatprep.subr.mxu0 0.0
        %469 = vmatpush1.xpose.msra.mxu0 0.0
        %470 = vmatprep.subr.mxu0 0.0
        %471 = vmatpush1.xpose.msra.mxu0 0.0
        %472 = vmatprep.mubr.f32.mxu0 0.0
        %473 = vmatmul.mubr.f32.gmra.mrb[0].mxu0 %v404
        %v474 = vpop.f32.mrb[0].mxu0
        %v475 = vadd.f32 0.0, %v474
        %v476 = vpop.f32.mrb[0].mxu0
        %477 = vdwg.mxu0
        %v478 = vsel %vm397, %v475, -1e+30
        %v479 = vsel %vm402, %v478, -inf
        %480 = vmax.xlane.f32.xlu0 %v479
        %v481 = vpop.xlane.xlu0 %480
        %v482 = vsub.f32 %v478, %v481
        %v483 = vmul.f32 %v482, 1.442695
        %v484 = vpow.pop %v483
        %v485 = vsel %vm402, %v484, 0.0
        %486 = vadd.xlane.f32.xlu0 %v485
        %v487 = vpop.xlane.xlu0 %486
        %v488 = vrcp.pop %v487
        %v489 = vmul.f32 %v484, %v488
        %490 = vst.msk [vmem:[%s306] sm:$0xff] %vm402, %v489
        %491 = vrot.lane.b32.xlu0 %v390, 64
        %v492 = vpop.permute.xlu0 %491
        %v495 = vsel %vm402, %v489, 0
        %497 = vmatprep.subr.mxu0 0.0
        %498 = vmatpush1.msra.mxu0 %v492
        %499 = vmatprep.subr.mxu0 0.0
        %500 = vmatpush1.msra.mxu0 0.0
        %501 = vmatprep.subr.mxu0 0.0
        %502 = vmatpush1.msra.mxu0 0.0
        %503 = vmatprep.subr.mxu0 0.0
        %504 = vmatpush1.msra.mxu0 0.0
        %505 = vmatprep.subr.mxu0 0.0
        %506 = vmatpush1.msra.mxu0 0.0
        %507 = vmatprep.subr.mxu0 0.0
        %508 = vmatpush1.msra.mxu0 0.0
        %509 = vmatprep.subr.mxu0 0.0
        %510 = vmatpush1.msra.mxu0 0.0
        %511 = vmatprep.subr.mxu0 0.0
        %512 = vmatpush1.msra.mxu0 0.0
        %513 = vmatprep.subr.mxu0 0.0
        %514 = vmatpush1.msra.mxu0 0.0
        %515 = vmatprep.subr.mxu0 0.0
        %516 = vmatpush1.msra.mxu0 0.0
        %517 = vmatprep.subr.mxu0 0.0
        %518 = vmatpush1.msra.mxu0 0.0
        %519 = vmatprep.subr.mxu0 0.0
        %520 = vmatpush1.msra.mxu0 0.0
        %521 = vmatprep.subr.mxu0 0.0
        %522 = vmatpush1.msra.mxu0 0.0
        %523 = vmatprep.subr.mxu0 0.0
        %524 = vmatpush1.msra.mxu0 0.0
        %525 = vmatprep.subr.mxu0 0.0
        %526 = vmatpush1.msra.mxu0 0.0
        %527 = vmatprep.subr.mxu0 0.0
        %528 = vmatpush1.msra.mxu0 0.0
        %529 = vmatprep.subr.mxu0 0.0
        %530 = vmatpush1.msra.mxu0 0.0
        %531 = vmatprep.subr.mxu0 0.0
        %532 = vmatpush1.msra.mxu0 0.0
        %533 = vmatprep.subr.mxu0 0.0
        %534 = vmatpush1.msra.mxu0 0.0
        %535 = vmatprep.subr.mxu0 0.0
        %536 = vmatpush1.msra.mxu0 0.0
        %537 = vmatprep.subr.mxu0 0.0
        %538 = vmatpush1.msra.mxu0 0.0
        %539 = vmatprep.subr.mxu0 0.0
        %540 = vmatpush1.msra.mxu0 0.0
        %541 = vmatprep.subr.mxu0 0.0
        %542 = vmatpush1.msra.mxu0 0.0
        %543 = vmatprep.subr.mxu0 0.0
        %544 = vmatpush1.msra.mxu0 0.0
        %545 = vmatprep.subr.mxu0 0.0
        %546 = vmatpush1.msra.mxu0 0.0
        %547 = vmatprep.subr.mxu0 0.0
        %548 = vmatpush1.msra.mxu0 0.0
        %549 = vmatprep.subr.mxu0 0.0
        %550 = vmatpush1.msra.mxu0 0.0
        %551 = vmatprep.subr.mxu0 0.0
        %552 = vmatpush1.msra.mxu0 0.0
        %553 = vmatprep.subr.mxu0 0.0
        %554 = vmatpush1.msra.mxu0 0.0
        %555 = vmatprep.subr.mxu0 0.0
        %556 = vmatpush1.msra.mxu0 0.0
        %557 = vmatprep.subr.mxu0 0.0
        %558 = vmatpush1.msra.mxu0 0.0
        %559 = vmatprep.subr.mxu0 0.0
        %560 = vmatpush1.msra.mxu0 0.0
        %561 = vmatprep.mubr.f32.mxu0 0.0
        %562 = vmatmul.mubr.f32.gmra.mrb[0].mxu0 %v495
        %v563 = vpop.f32.mrb[0].mxu0
        %v564 = vadd.f32 0.0, %v563
        %v565 = vpop.f32.mrb[0].mxu0
        %566 = vdwg.mxu0
        %567 = vrot.lane.b32.xlu0 %v398, 120
        %v568 = vpop.permute.xlu0 %567
        %569 = vrot.lane.b32.xlu0 %v390, 88
        %v570 = vpop.permute.xlu0 %569
        %v571 = vsel %vm402, %v568, 0
        %v573 = vsel %vm402, %v570, 0
        %575 = vmatprep.subr.mxu0 0.0
        %576 = vmatpush1.xpose.msra.mxu0 %v573
        %577 = vmatprep.subr.mxu0 0.0
        %578 = vmatpush1.xpose.msra.mxu0 0.0
        %579 = vmatprep.subr.mxu0 0.0
        %580 = vmatpush1.xpose.msra.mxu0 0.0
        %581 = vmatprep.subr.mxu0 0.0
        %582 = vmatpush1.xpose.msra.mxu0 0.0
        %583 = vmatprep.subr.mxu0 0.0
        %584 = vmatpush1.xpose.msra.mxu0 0.0
        %585 = vmatprep.subr.mxu0 0.0
        %586 = vmatpush1.xpose.msra.mxu0 0.0
        %587 = vmatprep.subr.mxu0 0.0
        %588 = vmatpush1.xpose.msra.mxu0 0.0
        %589 = vmatprep.subr.mxu0 0.0
        %590 = vmatpush1.xpose.msra.mxu0 0.0
        %591 = vmatprep.subr.mxu0 0.0
        %592 = vmatpush1.xpose.msra.mxu0 0.0
        %593 = vmatprep.subr.mxu0 0.0
        %594 = vmatpush1.xpose.msra.mxu0 0.0
        %595 = vmatprep.subr.mxu0 0.0
        %596 = vmatpush1.xpose.msra.mxu0 0.0
        %597 = vmatprep.subr.mxu0 0.0
        %598 = vmatpush1.xpose.msra.mxu0 0.0
        %599 = vmatprep.subr.mxu0 0.0
        %600 = vmatpush1.xpose.msra.mxu0 0.0
        %601 = vmatprep.subr.mxu0 0.0
        %602 = vmatpush1.xpose.msra.mxu0 0.0
        %603 = vmatprep.subr.mxu0 0.0
        %604 = vmatpush1.xpose.msra.mxu0 0.0
        %605 = vmatprep.subr.mxu0 0.0
        %606 = vmatpush1.xpose.msra.mxu0 0.0
        %607 = vmatprep.subr.mxu0 0.0
        %608 = vmatpush1.xpose.msra.mxu0 0.0
        %609 = vmatprep.subr.mxu0 0.0
        %610 = vmatpush1.xpose.msra.mxu0 0.0
        %611 = vmatprep.subr.mxu0 0.0
        %612 = vmatpush1.xpose.msra.mxu0 0.0
        %613 = vmatprep.subr.mxu0 0.0
        %614 = vmatpush1.xpose.msra.mxu0 0.0
        %615 = vmatprep.subr.mxu0 0.0
        %616 = vmatpush1.xpose.msra.mxu0 0.0
        %617 = vmatprep.subr.mxu0 0.0
        %618 = vmatpush1.xpose.msra.mxu0 0.0
        %619 = vmatprep.subr.mxu0 0.0
        %620 = vmatpush1.xpose.msra.mxu0 0.0
        %621 = vmatprep.subr.mxu0 0.0
        %622 = vmatpush1.xpose.msra.mxu0 0.0
        %623 = vmatprep.subr.mxu0 0.0
        %624 = vmatpush1.xpose.msra.mxu0 0.0
        %625 = vmatprep.subr.mxu0 0.0
        %626 = vmatpush1.xpose.msra.mxu0 0.0
        %627 = vmatprep.subr.mxu0 0.0
        %628 = vmatpush1.xpose.msra.mxu0 0.0
        %629 = vmatprep.subr.mxu0 0.0
        %630 = vmatpush1.xpose.msra.mxu0 0.0
        %631 = vmatprep.subr.mxu0 0.0
        %632 = vmatpush1.xpose.msra.mxu0 0.0
        %633 = vmatprep.subr.mxu0 0.0
        %634 = vmatpush1.xpose.msra.mxu0 0.0
        %635 = vmatprep.subr.mxu0 0.0
        %636 = vmatpush1.xpose.msra.mxu0 0.0
        %637 = vmatprep.subr.mxu0 0.0
        %638 = vmatpush1.xpose.msra.mxu0 0.0
        %639 = vmatprep.mubr.f32.mxu0 0.0
        %640 = vmatmul.mubr.f32.gmra.mrb[0].mxu0 %v571
        %v641 = vpop.f32.mrb[0].mxu0
        %v642 = vadd.f32 0.0, %v641
        %v643 = vpop.f32.mrb[0].mxu0
        %644 = vdwg.mxu0
        %v645 = vsel %vm397, %v642, -1e+30
        %v646 = vsel %vm402, %v645, -inf
        %647 = vmax.xlane.f32.xlu0 %v646
        %v648 = vpop.xlane.xlu0 %647
        %v649 = vsub.f32 %v645, %v648
        %v650 = vmul.f32 %v649, 1.442695
        %v651 = vpow.pop %v650
        %v652 = vsel %vm402, %v651, 0.0
        %653 = vadd.xlane.f32.xlu0 %v652
        %v654 = vpop.xlane.xlu0 %653
        %v655 = vrcp.pop %v654
        %v656 = vmul.f32 %v651, %v655
        %s657 = scalar_lea.vmem %s306, 8 [#allocation9]
        %658 = vst.msk [vmem:[%s657] sm:$0xff] %vm402, %v656
        %659 = vrot.lane.b32.xlu0 %v390, 56
        %v660 = vpop.permute.xlu0 %659
        %v663 = vsel %vm402, %v656, 0
        %665 = vmatprep.subr.mxu0 0.0
        %666 = vmatpush1.msra.mxu0 %v660
        %667 = vmatprep.subr.mxu0 0.0
        %668 = vmatpush1.msra.mxu0 0.0
        %669 = vmatprep.subr.mxu0 0.0
        %670 = vmatpush1.msra.mxu0 0.0
        %671 = vmatprep.subr.mxu0 0.0
        %672 = vmatpush1.msra.mxu0 0.0
        %673 = vmatprep.subr.mxu0 0.0
        %674 = vmatpush1.msra.mxu0 0.0
        %675 = vmatprep.subr.mxu0 0.0
        %676 = vmatpush1.msra.mxu0 0.0
        %677 = vmatprep.subr.mxu0 0.0
        %678 = vmatpush1.msra.mxu0 0.0
        %679 = vmatprep.subr.mxu0 0.0
        %680 = vmatpush1.msra.mxu0 0.0
        %681 = vmatprep.subr.mxu0 0.0
        %682 = vmatpush1.msra.mxu0 0.0
        %683 = vmatprep.subr.mxu0 0.0
        %684 = vmatpush1.msra.mxu0 0.0
        %685 = vmatprep.subr.mxu0 0.0
        %686 = vmatpush1.msra.mxu0 0.0
        %687 = vmatprep.subr.mxu0 0.0
        %688 = vmatpush1.msra.mxu0 0.0
        %689 = vmatprep.subr.mxu0 0.0
        %690 = vmatpush1.msra.mxu0 0.0
        %691 = vmatprep.subr.mxu0 0.0
        %692 = vmatpush1.msra.mxu0 0.0
        %693 = vmatprep.subr.mxu0 0.0
        %694 = vmatpush1.msra.mxu0 0.0
        %695 = vmatprep.subr.mxu0 0.0
        %696 = vmatpush1.msra.mxu0 0.0
        %697 = vmatprep.subr.mxu0 0.0
        %698 = vmatpush1.msra.mxu0 0.0
        %699 = vmatprep.subr.mxu0 0.0
        %700 = vmatpush1.msra.mxu0 0.0
        %701 = vmatprep.subr.mxu0 0.0
        %702 = vmatpush1.msra.mxu0 0.0
        %703 = vmatprep.subr.mxu0 0.0
        %704 = vmatpush1.msra.mxu0 0.0
        %705 = vmatprep.subr.mxu0 0.0
        %706 = vmatpush1.msra.mxu0 0.0
        %707 = vmatprep.subr.mxu0 0.0
        %708 = vmatpush1.msra.mxu0 0.0
        %709 = vmatprep.subr.mxu0 0.0
        %710 = vmatpush1.msra.mxu0 0.0
        %711 = vmatprep.subr.mxu0 0.0
        %712 = vmatpush1.msra.mxu0 0.0
        %713 = vmatprep.subr.mxu0 0.0
        %714 = vmatpush1.msra.mxu0 0.0
        %715 = vmatprep.subr.mxu0 0.0
        %716 = vmatpush1.msra.mxu0 0.0
        %717 = vmatprep.subr.mxu0 0.0
        %718 = vmatpush1.msra.mxu0 0.0
        %719 = vmatprep.subr.mxu0 0.0
        %720 = vmatpush1.msra.mxu0 0.0
        %721 = vmatprep.subr.mxu0 0.0
        %722 = vmatpush1.msra.mxu0 0.0
        %723 = vmatprep.subr.mxu0 0.0
        %724 = vmatpush1.msra.mxu0 0.0
        %725 = vmatprep.subr.mxu0 0.0
        %726 = vmatpush1.msra.mxu0 0.0
        %727 = vmatprep.subr.mxu0 0.0
        %728 = vmatpush1.msra.mxu0 0.0
        %729 = vmatprep.mubr.f32.mxu0 0.0
        %730 = vmatmul.mubr.f32.gmra.mrb[0].mxu0 %v663
        %v731 = vpop.f32.mrb[0].mxu0
        %v732 = vadd.f32 0.0, %v731
        %v733 = vpop.f32.mrb[0].mxu0
        %734 = vdwg.mxu0
        %735 = vrot.lane.b32.xlu0 %v398, 112
        %v736 = vpop.permute.xlu0 %735
        %737 = vrot.lane.b32.xlu0 %v390, 80
        %v738 = vpop.permute.xlu0 %737
        %v739 = vsel %vm402, %v736, 0
        %v741 = vsel %vm402, %v738, 0
        %743 = vmatprep.subr.mxu0 0.0
        %744 = vmatpush1.xpose.msra.mxu0 %v741
        %745 = vmatprep.subr.mxu0 0.0
        %746 = vmatpush1.xpose.msra.mxu0 0.0
        %747 = vmatprep.subr.mxu0 0.0
        %748 = vmatpush1.xpose.msra.mxu0 0.0
        %749 = vmatprep.subr.mxu0 0.0
        %750 = vmatpush1.xpose.msra.mxu0 0.0
        %751 = vmatprep.subr.mxu0 0.0
        %752 = vmatpush1.xpose.msra.mxu0 0.0
        %753 = vmatprep.subr.mxu0 0.0
        %754 = vmatpush1.xpose.msra.mxu0 0.0
        %755 = vmatprep.subr.mxu0 0.0
        %756 = vmatpush1.xpose.msra.mxu0 0.0
        %757 = vmatprep.subr.mxu0 0.0
        %758 = vmatpush1.xpose.msra.mxu0 0.0
        %759 = vmatprep.subr.mxu0 0.0
        %760 = vmatpush1.xpose.msra.mxu0 0.0
        %761 = vmatprep.subr.mxu0 0.0
        %762 = vmatpush1.xpose.msra.mxu0 0.0
        %763 = vmatprep.subr.mxu0 0.0
        %764 = vmatpush1.xpose.msra.mxu0 0.0
        %765 = vmatprep.subr.mxu0 0.0
        %766 = vmatpush1.xpose.msra.mxu0 0.0
        %767 = vmatprep.subr.mxu0 0.0
        %768 = vmatpush1.xpose.msra.mxu0 0.0
        %769 = vmatprep.subr.mxu0 0.0
        %770 = vmatpush1.xpose.msra.mxu0 0.0
        %771 = vmatprep.subr.mxu0 0.0
        %772 = vmatpush1.xpose.msra.mxu0 0.0
        %773 = vmatprep.subr.mxu0 0.0
        %774 = vmatpush1.xpose.msra.mxu0 0.0
        %775 = vmatprep.subr.mxu0 0.0
        %776 = vmatpush1.xpose.msra.mxu0 0.0
        %777 = vmatprep.subr.mxu0 0.0
        %778 = vmatpush1.xpose.msra.mxu0 0.0
        %779 = vmatprep.subr.mxu0 0.0
        %780 = vmatpush1.xpose.msra.mxu0 0.0
        %781 = vmatprep.subr.mxu0 0.0
        %782 = vmatpush1.xpose.msra.mxu0 0.0
        %783 = vmatprep.subr.mxu0 0.0
        %784 = vmatpush1.xpose.msra.mxu0 0.0
        %785 = vmatprep.subr.mxu0 0.0
        %786 = vmatpush1.xpose.msra.mxu0 0.0
        %787 = vmatprep.subr.mxu0 0.0
        %788 = vmatpush1.xpose.msra.mxu0 0.0
        %789 = vmatprep.subr.mxu0 0.0
        %790 = vmatpush1.xpose.msra.mxu0 0.0
        %791 = vmatprep.subr.mxu0 0.0
        %792 = vmatpush1.xpose.msra.mxu0 0.0
        %793 = vmatprep.subr.mxu0 0.0
        %794 = vmatpush1.xpose.msra.mxu0 0.0
        %795 = vmatprep.subr.mxu0 0.0
        %796 = vmatpush1.xpose.msra.mxu0 0.0
        %797 = vmatprep.subr.mxu0 0.0
        %798 = vmatpush1.xpose.msra.mxu0 0.0
        %799 = vmatprep.subr.mxu0 0.0
        %800 = vmatpush1.xpose.msra.mxu0 0.0
        %801 = vmatprep.subr.mxu0 0.0
        %802 = vmatpush1.xpose.msra.mxu0 0.0
        %803 = vmatprep.subr.mxu0 0.0
        %804 = vmatpush1.xpose.msra.mxu0 0.0
        %805 = vmatprep.subr.mxu0 0.0
        %806 = vmatpush1.xpose.msra.mxu0 0.0
        %807 = vmatprep.mubr.f32.mxu0 0.0
        %808 = vmatmul.mubr.f32.gmra.mrb[0].mxu0 %v739
        %v809 = vpop.f32.mrb[0].mxu0
        %v810 = vadd.f32 0.0, %v809
        %v811 = vpop.f32.mrb[0].mxu0
        %812 = vdwg.mxu0
        %v813 = vsel %vm397, %v810, -1e+30
        %v814 = vsel %vm402, %v813, -inf
        %815 = vmax.xlane.f32.xlu0 %v814
        %v816 = vpop.xlane.xlu0 %815
        %v817 = vsub.f32 %v813, %v816
        %v818 = vmul.f32 %v817, 1.442695
        %v819 = vpow.pop %v818
        %v820 = vsel %vm402, %v819, 0.0
        %821 = vadd.xlane.f32.xlu0 %v820
        %v822 = vpop.xlane.xlu0 %821
        %v823 = vrcp.pop %v822
        %v824 = vmul.f32 %v819, %v823
        %s825 = scalar_lea.vmem %s306, 16 [#allocation9]
        %826 = vst.msk [vmem:[%s825] sm:$0xff] %vm402, %v824
        %827 = vrot.lane.b32.xlu0 %v390, 48
        %v828 = vpop.permute.xlu0 %827
        %v831 = vsel %vm402, %v824, 0
        %833 = vmatprep.subr.mxu0 0.0
        %834 = vmatpush1.msra.mxu0 %v828
        %835 = vmatprep.subr.mxu0 0.0
        %836 = vmatpush1.msra.mxu0 0.0
        %837 = vmatprep.subr.mxu0 0.0
        %838 = vmatpush1.msra.mxu0 0.0
        %839 = vmatprep.subr.mxu0 0.0
        %840 = vmatpush1.msra.mxu0 0.0
        %841 = vmatprep.subr.mxu0 0.0
        %842 = vmatpush1.msra.mxu0 0.0
        %843 = vmatprep.subr.mxu0 0.0
        %844 = vmatpush1.msra.mxu0 0.0
        %845 = vmatprep.subr.mxu0 0.0
        %846 = vmatpush1.msra.mxu0 0.0
        %847 = vmatprep.subr.mxu0 0.0
        %848 = vmatpush1.msra.mxu0 0.0
        %849 = vmatprep.subr.mxu0 0.0
        %850 = vmatpush1.msra.mxu0 0.0
        %851 = vmatprep.subr.mxu0 0.0
        %852 = vmatpush1.msra.mxu0 0.0
        %853 = vmatprep.subr.mxu0 0.0
        %854 = vmatpush1.msra.mxu0 0.0
        %855 = vmatprep.subr.mxu0 0.0
        %856 = vmatpush1.msra.mxu0 0.0
        %857 = vmatprep.subr.mxu0 0.0
        %858 = vmatpush1.msra.mxu0 0.0
        %859 = vmatprep.subr.mxu0 0.0
        %860 = vmatpush1.msra.mxu0 0.0
        %861 = vmatprep.subr.mxu0 0.0
        %862 = vmatpush1.msra.mxu0 0.0
        %863 = vmatprep.subr.mxu0 0.0
        %864 = vmatpush1.msra.mxu0 0.0
        %865 = vmatprep.subr.mxu0 0.0
        %866 = vmatpush1.msra.mxu0 0.0
        %867 = vmatprep.subr.mxu0 0.0
        %868 = vmatpush1.msra.mxu0 0.0
        %869 = vmatprep.subr.mxu0 0.0
        %870 = vmatpush1.msra.mxu0 0.0
        %871 = vmatprep.subr.mxu0 0.0
        %872 = vmatpush1.msra.mxu0 0.0
        %873 = vmatprep.subr.mxu0 0.0
        %874 = vmatpush1.msra.mxu0 0.0
        %875 = vmatprep.subr.mxu0 0.0
        %876 = vmatpush1.msra.mxu0 0.0
        %877 = vmatprep.subr.mxu0 0.0
        %878 = vmatpush1.msra.mxu0 0.0
        %879 = vmatprep.subr.mxu0 0.0
        %880 = vmatpush1.msra.mxu0 0.0
        %881 = vmatprep.subr.mxu0 0.0
        %882 = vmatpush1.msra.mxu0 0.0
        %883 = vmatprep.subr.mxu0 0.0
        %884 = vmatpush1.msra.mxu0 0.0
        %885 = vmatprep.subr.mxu0 0.0
        %886 = vmatpush1.msra.mxu0 0.0
        %887 = vmatprep.subr.mxu0 0.0
        %888 = vmatpush1.msra.mxu0 0.0
        %889 = vmatprep.subr.mxu0 0.0
        %890 = vmatpush1.msra.mxu0 0.0
        %891 = vmatprep.subr.mxu0 0.0
        %892 = vmatpush1.msra.mxu0 0.0
        %893 = vmatprep.subr.mxu0 0.0
        %894 = vmatpush1.msra.mxu0 0.0
        %895 = vmatprep.subr.mxu0 0.0
        %896 = vmatpush1.msra.mxu0 0.0
        %897 = vmatprep.mubr.f32.mxu0 0.0
        %898 = vmatmul.mubr.f32.gmra.mrb[0].mxu0 %v831
        %v899 = vpop.f32.mrb[0].mxu0
        %v900 = vadd.f32 0.0, %v899
        %v901 = vpop.f32.mrb[0].mxu0
        %902 = vdwg.mxu0
        %903 = vrot.lane.b32.xlu0 %v398, 104
        %v904 = vpop.permute.xlu0 %903
        %905 = vrot.lane.b32.xlu0 %v390, 72
        %v906 = vpop.permute.xlu0 %905
        %v907 = vsel %vm402, %v904, 0
        %v909 = vsel %vm402, %v906, 0
        %911 = vmatprep.subr.mxu0 0.0
        %912 = vmatpush1.xpose.msra.mxu0 %v909
        %913 = vmatprep.subr.mxu0 0.0
        %914 = vmatpush1.xpose.msra.mxu0 0.0
        %915 = vmatprep.subr.mxu0 0.0
        %916 = vmatpush1.xpose.msra.mxu0 0.0
        %917 = vmatprep.subr.mxu0 0.0
        %918 = vmatpush1.xpose.msra.mxu0 0.0
        %919 = vmatprep.subr.mxu0 0.0
        %920 = vmatpush1.xpose.msra.mxu0 0.0
        %921 = vmatprep.subr.mxu0 0.0
        %922 = vmatpush1.xpose.msra.mxu0 0.0
        %923 = vmatprep.subr.mxu0 0.0
        %924 = vmatpush1.xpose.msra.mxu0 0.0
        %925 = vmatprep.subr.mxu0 0.0
        %926 = vmatpush1.xpose.msra.mxu0 0.0
        %927 = vmatprep.subr.mxu0 0.0
        %928 = vmatpush1.xpose.msra.mxu0 0.0
        %929 = vmatprep.subr.mxu0 0.0
        %930 = vmatpush1.xpose.msra.mxu0 0.0
        %931 = vmatprep.subr.mxu0 0.0
        %932 = vmatpush1.xpose.msra.mxu0 0.0
        %933 = vmatprep.subr.mxu0 0.0
        %934 = vmatpush1.xpose.msra.mxu0 0.0
        %935 = vmatprep.subr.mxu0 0.0
        %936 = vmatpush1.xpose.msra.mxu0 0.0
        %937 = vmatprep.subr.mxu0 0.0
        %938 = vmatpush1.xpose.msra.mxu0 0.0
        %939 = vmatprep.subr.mxu0 0.0
        %940 = vmatpush1.xpose.msra.mxu0 0.0
        %941 = vmatprep.subr.mxu0 0.0
        %942 = vmatpush1.xpose.msra.mxu0 0.0
        %943 = vmatprep.subr.mxu0 0.0
        %944 = vmatpush1.xpose.msra.mxu0 0.0
        %945 = vmatprep.subr.mxu0 0.0
        %946 = vmatpush1.xpose.msra.mxu0 0.0
        %947 = vmatprep.subr.mxu0 0.0
        %948 = vmatpush1.xpose.msra.mxu0 0.0
        %949 = vmatprep.subr.mxu0 0.0
        %950 = vmatpush1.xpose.msra.mxu0 0.0
        %951 = vmatprep.subr.mxu0 0.0
        %952 = vmatpush1.xpose.msra.mxu0 0.0
        %953 = vmatprep.subr.mxu0 0.0
        %954 = vmatpush1.xpose.msra.mxu0 0.0
        %955 = vmatprep.subr.mxu0 0.0
        %956 = vmatpush1.xpose.msra.mxu0 0.0
        %957 = vmatprep.subr.mxu0 0.0
        %958 = vmatpush1.xpose.msra.mxu0 0.0
        %959 = vmatprep.subr.mxu0 0.0
        %960 = vmatpush1.xpose.msra.mxu0 0.0
        %961 = vmatprep.subr.mxu0 0.0
        %962 = vmatpush1.xpose.msra.mxu0 0.0
        %963 = vmatprep.subr.mxu0 0.0
        %964 = vmatpush1.xpose.msra.mxu0 0.0
        %965 = vmatprep.subr.mxu0 0.0
        %966 = vmatpush1.xpose.msra.mxu0 0.0
        %967 = vmatprep.subr.mxu0 0.0
        %968 = vmatpush1.xpose.msra.mxu0 0.0
        %969 = vmatprep.subr.mxu0 0.0
        %970 = vmatpush1.xpose.msra.mxu0 0.0
        %971 = vmatprep.subr.mxu0 0.0
        %972 = vmatpush1.xpose.msra.mxu0 0.0
        %973 = vmatprep.subr.mxu0 0.0
        %974 = vmatpush1.xpose.msra.mxu0 0.0
        %975 = vmatprep.mubr.f32.mxu0 0.0
        %976 = vmatmul.mubr.f32.gmra.mrb[0].mxu0 %v907
        %v977 = vpop.f32.mrb[0].mxu0
        %v978 = vadd.f32 0.0, %v977
        %v979 = vpop.f32.mrb[0].mxu0
        %980 = vdwg.mxu0
        %v981 = vsel %vm397, %v978, -1e+30
        %v982 = vsel %vm402, %v981, -inf
        %983 = vmax.xlane.f32.xlu0 %v982
        %v984 = vpop.xlane.xlu0 %983
        %v985 = vsub.f32 %v981, %v984
        %v986 = vmul.f32 %v985, 1.442695
        %v987 = vpow.pop %v986
        %v988 = vsel %vm402, %v987, 0.0
        %989 = vadd.xlane.f32.xlu0 %v988
        %v990 = vpop.xlane.xlu0 %989
        %v991 = vrcp.pop %v990
        %v992 = vmul.f32 %v987, %v991
        %s993 = scalar_lea.vmem %s306, 24 [#allocation9]
        %994 = vst.msk [vmem:[%s993] sm:$0xff] %vm402, %v992
        %995 = vrot.lane.b32.xlu0 %v390, 40
        %v996 = vpop.permute.xlu0 %995
        %v999 = vsel %vm402, %v992, 0
        %1001 = vmatprep.subr.mxu0 0.0
        %1002 = vmatpush1.msra.mxu0 %v996
        %1003 = vmatprep.subr.mxu0 0.0
        %1004 = vmatpush1.msra.mxu0 0.0
        %1005 = vmatprep.subr.mxu0 0.0
        %1006 = vmatpush1.msra.mxu0 0.0
        %1007 = vmatprep.subr.mxu0 0.0
        %1008 = vmatpush1.msra.mxu0 0.0
        %1009 = vmatprep.subr.mxu0 0.0
        %1010 = vmatpush1.msra.mxu0 0.0
        %1011 = vmatprep.subr.mxu0 0.0
        %1012 = vmatpush1.msra.mxu0 0.0
        %1013 = vmatprep.subr.mxu0 0.0
        %1014 = vmatpush1.msra.mxu0 0.0
        %1015 = vmatprep.subr.mxu0 0.0
        %1016 = vmatpush1.msra.mxu0 0.0
        %1017 = vmatprep.subr.mxu0 0.0
        %1018 = vmatpush1.msra.mxu0 0.0
        %1019 = vmatprep.subr.mxu0 0.0
        %1020 = vmatpush1.msra.mxu0 0.0
        %1021 = vmatprep.subr.mxu0 0.0
        %1022 = vmatpush1.msra.mxu0 0.0
        %1023 = vmatprep.subr.mxu0 0.0
        %1024 = vmatpush1.msra.mxu0 0.0
        %1025 = vmatprep.subr.mxu0 0.0
        %1026 = vmatpush1.msra.mxu0 0.0
        %1027 = vmatprep.subr.mxu0 0.0
        %1028 = vmatpush1.msra.mxu0 0.0
        %1029 = vmatprep.subr.mxu0 0.0
        %1030 = vmatpush1.msra.mxu0 0.0
        %1031 = vmatprep.subr.mxu0 0.0
        %1032 = vmatpush1.msra.mxu0 0.0
        %1033 = vmatprep.subr.mxu0 0.0
        %1034 = vmatpush1.msra.mxu0 0.0
        %1035 = vmatprep.subr.mxu0 0.0
        %1036 = vmatpush1.msra.mxu0 0.0
        %1037 = vmatprep.subr.mxu0 0.0
        %1038 = vmatpush1.msra.mxu0 0.0
        %1039 = vmatprep.subr.mxu0 0.0
        %1040 = vmatpush1.msra.mxu0 0.0
        %1041 = vmatprep.subr.mxu0 0.0
        %1042 = vmatpush1.msra.mxu0 0.0
        %1043 = vmatprep.subr.mxu0 0.0
        %1044 = vmatpush1.msra.mxu0 0.0
        %1045 = vmatprep.subr.mxu0 0.0
        %1046 = vmatpush1.msra.mxu0 0.0
        %1047 = vmatprep.subr.mxu0 0.0
        %1048 = vmatpush1.msra.mxu0 0.0
        %1049 = vmatprep.subr.mxu0 0.0
        %1050 = vmatpush1.msra.mxu0 0.0
        %1051 = vmatprep.subr.mxu0 0.0
        %1052 = vmatpush1.msra.mxu0 0.0
        %1053 = vmatprep.subr.mxu0 0.0
        %1054 = vmatpush1.msra.mxu0 0.0
        %1055 = vmatprep.subr.mxu0 0.0
        %1056 = vmatpush1.msra.mxu0 0.0
        %1057 = vmatprep.subr.mxu0 0.0
        %1058 = vmatpush1.msra.mxu0 0.0
        %1059 = vmatprep.subr.mxu0 0.0
        %1060 = vmatpush1.msra.mxu0 0.0
        %1061 = vmatprep.subr.mxu0 0.0
        %1062 = vmatpush1.msra.mxu0 0.0
        %1063 = vmatprep.subr.mxu0 0.0
        %1064 = vmatpush1.msra.mxu0 0.0
        %1065 = vmatprep.mubr.f32.mxu0 0.0
        %1066 = vmatmul.mubr.f32.gmra.mrb[0].mxu0 %v999
        %v1067 = vpop.f32.mrb[0].mxu0
        %v1068 = vadd.f32 0.0, %v1067
        %v1069 = vpop.f32.mrb[0].mxu0
        %1070 = vdwg.mxu0
        %1072 = vrot.lane.b32.xlu0 %v732, 8
        %v1073 = vpop.permute.xlu0 %1072
        %1076 = vrot.lane.b32.xlu0 %v900, 16
        %v1077 = vpop.permute.xlu0 %1076
        %1080 = vrot.lane.b32.xlu0 %v1068, 24
        %v1081 = vpop.permute.xlu0 %1080
        %v1083 = vsel %vm402, %v564, %v1073
        %vm1084 = vcmask 130048
        %v1085 = vsel %vm1084, %v1083, %v1077
        %vm1086 = vcmask 195584
        %v1087 = vsel %vm1086, %v1085, %v1081
        %v1088 = vld [vmem:[#allocation7] sm:$0xff]
        %v1089 = vld [vmem:[#allocation7 + $0x8] sm:$0xff]
        %v1090 = vld [vmem:[#allocation7 + $0x10] sm:$0xff]
        %v1091 = vld [vmem:[#allocation7 + $0x18] sm:$0xff]
        %v1092 = vld [vmem:[%s4] sm:$0x1]
        %v1094 = vlaneseq
        %v1095 = vshrl.u32 %v1094, 7
        %v1096 = vsub.s32 0, %v1095
        %v1097 = vrot.slane %v1092, %v1096
        %v1100 = vsel %vm319, %v1087, 0
        %1102 = vmatprep.subr.mxu0 0.0
        %1103 = vmatpush1.msra.mxu0 %v1088
        %1104 = vmatprep.subr.mxu0 0.0
        %1105 = vmatpush1.msra.mxu0 %v1089
        %1106 = vmatprep.subr.mxu0 0.0
        %1107 = vmatpush1.msra.mxu0 %v1090
        %1108 = vmatprep.subr.mxu0 0.0
        %1109 = vmatpush1.msra.mxu0 %v1091
        %1110 = vmatprep.subr.mxu0 0.0
        %1111 = vmatpush1.msra.mxu0 0.0
        %1112 = vmatprep.subr.mxu0 0.0
        %1113 = vmatpush1.msra.mxu0 0.0
        %1114 = vmatprep.subr.mxu0 0.0
        %1115 = vmatpush1.msra.mxu0 0.0
        %1116 = vmatprep.subr.mxu0 0.0
        %1117 = vmatpush1.msra.mxu0 0.0
        %1118 = vmatprep.subr.mxu0 0.0
        %1119 = vmatpush1.msra.mxu0 0.0
        %1120 = vmatprep.subr.mxu0 0.0
        %1121 = vmatpush1.msra.mxu0 0.0
        %1122 = vmatprep.subr.mxu0 0.0
        %1123 = vmatpush1.msra.mxu0 0.0
        %1124 = vmatprep.subr.mxu0 0.0
        %1125 = vmatpush1.msra.mxu0 0.0
        %1126 = vmatprep.subr.mxu0 0.0
        %1127 = vmatpush1.msra.mxu0 0.0
        %1128 = vmatprep.subr.mxu0 0.0
        %1129 = vmatpush1.msra.mxu0 0.0
        %1130 = vmatprep.subr.mxu0 0.0
        %1131 = vmatpush1.msra.mxu0 0.0
        %1132 = vmatprep.subr.mxu0 0.0
        %1133 = vmatpush1.msra.mxu0 0.0
        %1134 = vmatprep.subr.mxu0 0.0
        %1135 = vmatpush1.msra.mxu0 0.0
        %1136 = vmatprep.subr.mxu0 0.0
        %1137 = vmatpush1.msra.mxu0 0.0
        %1138 = vmatprep.subr.mxu0 0.0
        %1139 = vmatpush1.msra.mxu0 0.0
        %1140 = vmatprep.subr.mxu0 0.0
        %1141 = vmatpush1.msra.mxu0 0.0
        %1142 = vmatprep.subr.mxu0 0.0
        %1143 = vmatpush1.msra.mxu0 0.0
        %1144 = vmatprep.subr.mxu0 0.0
        %1145 = vmatpush1.msra.mxu0 0.0
        %1146 = vmatprep.subr.mxu0 0.0
        %1147 = vmatpush1.msra.mxu0 0.0
        %1148 = vmatprep.subr.mxu0 0.0
        %1149 = vmatpush1.msra.mxu0 0.0
        %1150 = vmatprep.subr.mxu0 0.0
        %1151 = vmatpush1.msra.mxu0 0.0
        %1152 = vmatprep.subr.mxu0 0.0
        %1153 = vmatpush1.msra.mxu0 0.0
        %1154 = vmatprep.subr.mxu0 0.0
        %1155 = vmatpush1.msra.mxu0 0.0
        %1156 = vmatprep.subr.mxu0 0.0
        %1157 = vmatpush1.msra.mxu0 0.0
        %1158 = vmatprep.subr.mxu0 0.0
        %1159 = vmatpush1.msra.mxu0 0.0
        %1160 = vmatprep.subr.mxu0 0.0
        %1161 = vmatpush1.msra.mxu0 0.0
        %1162 = vmatprep.subr.mxu0 0.0
        %1163 = vmatpush1.msra.mxu0 0.0
        %1164 = vmatprep.subr.mxu0 0.0
        %1165 = vmatpush1.msra.mxu0 0.0
        %1166 = vmatprep.mubr.f32.mxu0 0.0
        %1167 = vmatmul.mubr.f32.gmra.mrb[0].mxu0 %v1100
        %v1168 = vpop.f32.mrb[0].mxu0
        %v1169 = vadd.f32 %v1097, %v1168
        %v1170 = vpop.f32.mrb[0].mxu0
        %1171 = vdwg.mxu0
        %1172 = vst.msk [vmem:[%s299] sm:$0xff] %vm319, %v1169
        %s1173 = sand.u32 %s146, 1
        %s1174 = scalar_lea.sflag [#allocation4], %s1173
        %s1175 = sand.u32 %s146, 1
        %s1176 = smul.addr %s1175, 8
        %s1177 = scalar_lea.vmem [#allocation8], %s1176
        %s1178 = sand.u32 %s172, 1
        %s1179 = scalar_lea.sflag [#allocation10], %s1178
        %s1180 = sand.u32 %s172, 1
        %s1181 = smul.addr %s1180, 32
        %s1182 = scalar_lea.vmem [#allocation9], %s1181
        // Predicated region
        $region53: #{tpu_custom_call.1} parent=39 // pred_check
          %p1183 = pneg %p156
        $region54: #{tpu_custom_call.1} parent=39 // pred_check_branch
          %1185 = sbr.rel (%p1183) target = $region56
        $region55: #{tpu_custom_call.1} parent=39 // pred_region
          %s1187 = ssub.s32 128, 128
          %1188 = vsyncadd %s1174, %s1187
          %s1189 = smul.addr %s28, 128
          %s1190 = scalar_lea.hbm %s5, %s1189
          %s1192 = sshll.u32 %s1177, 4
          %s1193 = int_to_ptr.vmem [resolvable:$true] %s1192
          %1195 = dma.vmem_to_hbm [thread:$0]  %s1193, 128, %s1190, %s1174
        $region56: #{tpu_custom_call.1} parent=39 // pred_fallthru
          _
        // Predicated region
        $region57: #{tpu_custom_call.1} parent=39 // pred_check
          %p1196 = pneg %p182
        $region58: #{tpu_custom_call.1} parent=39 // pred_check_branch
          %1198 = sbr.rel (%p1196) target = $region60
        $region59: #{tpu_custom_call.1} parent=39 // pred_region
          %s1200 = ssub.s32 512, 512
          %1201 = vsyncadd %s1179, %s1200
          %s1202 = smul.addr %s28, 4
          %s1203 = smul.addr %s1202, 128
          %s1204 = scalar_lea.hbm %s6, %s1203
          %s1205 = sshll.u32 %s1182, 4
          %s1206 = int_to_ptr.vmem [resolvable:$true] %s1205
          %1211 = dma.vmem_to_hbm [thread:$0]  %s1206, 512, %s1204, %s1179, 128, 128, 8
        $region60: #{tpu_custom_call.1} parent=39 // pred_fallthru
          _
      $region40: #{tpu_custom_call.1} parent=5 // pred_fallthru
        _
      %p1212 = scmp.le.s32.totalorder 2, %s23
      // Predicated region
      $region61: #{tpu_custom_call.1} parent=5 // pred_check
        %p1213 = pneg %p1212
      $region62: #{tpu_custom_call.1} parent=5 // pred_check_branch
        %1215 = sbr.rel (%p1213) target = $region64
      $region63: #{tpu_custom_call.1} parent=5 // pred_region
        %s1216 = ssub.s32 %s23, 2
        // Predicated region
        $region65: #{tpu_custom_call.1} parent=63 // pred_check
          %p1217 = pneg %p162
        $region66: #{tpu_custom_call.1} parent=63 // pred_check_branch
          %1219 = sbr.rel (%p1217) target = $region68
        $region67: #{tpu_custom_call.1} parent=63 // pred_region
          %s1220 = sand.u32 %s147, 1
          %s1221 = scalar_lea.sflag [#allocation4], %s1220
          %s1222 = sand.u32 %s147, 1
          %s1223 = smul.addr %s1222, 8
          %s1224 = scalar_lea.vmem [#allocation8], %s1223
          %1225 = dma.done %s1221, 128
        $region68: #{tpu_custom_call.1} parent=63 // pred_fallthru
          _
        // Predicated region
        $region69: #{tpu_custom_call.1} parent=63 // pred_check
          %p1226 = pneg %p188
        $region70: #{tpu_custom_call.1} parent=63 // pred_check_branch
          %1228 = sbr.rel (%p1226) target = $region72
        $region71: #{tpu_custom_call.1} parent=63 // pred_region
          %s1229 = sand.u32 %s173, 1
          %s1230 = scalar_lea.sflag [#allocation10], %s1229
          %s1231 = sand.u32 %s173, 1
          %s1232 = smul.addr %s1231, 32
          %s1233 = scalar_lea.vmem [#allocation9], %s1232
          %1234 = dma.done %s1230, 512
        $region72: #{tpu_custom_call.1} parent=63 // pred_fallthru
          _
      $region64: #{tpu_custom_call.1} parent=5 // pred_fallthru
        _
    $region6: #{tpu_custom_call.1} parent=1 // loop_footer
      %s27 = sadd.s32 1, %s23
    $region7: #{tpu_custom_call.1} parent=1 // loop_footer_branch
      %22 = sbr.rel target = $region3
    $region8: #{tpu_custom_call.1} parent=1 // loop_exit
      _
    %1235 = vsyncpa [#allocation3], 1
    %s1236 = scalar_lea.sflag [#allocation3], 1
    %1237 = vsyncpa %s1236, 1
    %1238 = vsyncpa [#allocation6], 1
    %1239 = vsyncpa [#allocation4], 1
    %s1240 = scalar_lea.sflag [#allocation4], 1
    %1241 = vsyncpa %s1240, 1
    %1242 = vsyncpa [#allocation10], 1
    %s1243 = scalar_lea.sflag [#allocation10], 1
    %1244 = vsyncpa %s1243, 1

</llo_original>
